<compile_context>
chip_gen: v6e
topology: v6e:2x2x1
jax: 0.10.0
libtpu: 0.0.40
codegen_flags: <defaults>
</compile_context>

<pallas_src>
import jax
import jax.numpy as jnp
from jax.experimental import pallas as pl
from jax.experimental.pallas import tpu as pltpu


def _encoder_kernel(
    x_ref,        # (B, T, D)   full sequence (batch-first, original layout)
    w_ih_ref,     # (D, 3H)     [W_ir | W_iz | W_in]
    w_hh_ref,     # (H, 3H)     [W_hr | W_hz | W_hn]
    b_x_ref,      # (1, 3H)     [b_ir+b_hr | b_iz+b_hz | b_in]
    b_hn_ref,     # (1, H)      hidden bias of the n-gate (stays inside r*(.))
    w_head_ref,   # (H, 2L)     [W_mu | W_var]
    b_head_ref,   # (1, 2L)     [b_mu | b_var]
    out_ref,      # (B, 2L)     [mu | var]
):
    B, T, D = x_ref.shape
    H = w_hh_ref.shape[0]
    G = 3 * H

    # --- Prologue: fused input projection for ALL timesteps in one MXU pass.
    x_all = x_ref[...]                                        # (B, T, D)
    xp = jnp.dot(
        x_all.reshape(B * T, D), w_ih_ref[...],
        preferred_element_type=jnp.float32,
    ) + b_x_ref[...]                                          # (B*T, 3H)
    xp = xp.reshape(B, T, G)                                  # (B, T, 3H)

    w_hh = w_hh_ref[...]                                      # (H, 3H)
    b_hn = b_hn_ref[...]                                      # (1, H)

    # --- Recurrence: fully unrolled (T static & small).  Only the H x 3H
    #     recurrent matmul + gate elementwise math remain serial.
    h = jnp.zeros((B, H), jnp.float32)
    for t in range(T):
        xp_t = xp[:, t, :]                                    # (B, 3H), static slice
        hp = jnp.dot(h, w_hh, preferred_element_type=jnp.float32)  # (B, 3H)
        r = jax.nn.sigmoid(xp_t[:, :H] + hp[:, :H])
        z = jax.nn.sigmoid(xp_t[:, H:2 * H] + hp[:, H:2 * H])
        n = jnp.tanh(xp_t[:, 2 * H:] + r * (hp[:, 2 * H:] + b_hn))
        h = (1.0 - z) * n + z * h

    # --- Fused heads, single lane-dense store: out = [h@W_mu + b_mu | h@W_var + b_var]
    out_ref[...] = (
        jnp.dot(h, w_head_ref[...], preferred_element_type=jnp.float32)
        + b_head_ref[...]
    ).astype(out_ref.dtype)


def encoder_forward(x, params):
    """x: [B, T, input_dim] (batch_first, matching the PyTorch module)."""
    B, T, D = x.shape
    H = params["w_hh"].shape[0]
    L = params["w_head"].shape[1] // 2

    # Pad batch up to sublane granularity (8) so matmuls / vregs use full rows.
    B_pad = max(8, ((B + 7) // 8) * 8)
    if B_pad != B:
        x = jnp.pad(x, ((0, B_pad - B), (0, 0), (0, 0)))

    vmem = lambda: pl.BlockSpec(memory_space=pltpu.MemorySpace.VMEM)

    out = pl.pallas_call(
        _encoder_kernel,
        out_shape=jax.ShapeDtypeStruct((B_pad, 2 * L), jnp.float32),
        in_specs=[vmem() for _ in range(7)],
        out_specs=vmem(),
    )(
        x,
        params["w_ih"], params["w_hh"],
        params["b_x"], params["b_hn"],
        params["w_head"], params["b_head"],
    )

    mu = out[:B, :L]
    var = out[:B, L:]
    return mu, var


def init_params(key, input_dim, hidden_dim, latent_dim):
    """Deterministic synthetic init with PyTorch-equivalent shapes, pre-fused.

    PyTorch stores weight_ih_l0 [3H, D] / weight_hh_l0 [3H, H] (gate order
    r, z, n).  Here each gate block is pre-transposed (x @ W convention) and
    concatenated column-wise.  b_hr/b_hz are folded into the x-side bias
    (they are added before the sigmoid); b_hn stays separate because it sits
    inside the r * (.) term of the n-gate.
    """
    D, H, L = input_dim, hidden_dim, latent_dim
    s = 1.0 / jnp.sqrt(H)
    ks = jax.random.split(key, 16)
    u = lambda k, shape: jax.random.uniform(k, shape, jnp.float32, -s, s)

    w_ir, w_iz, w_in = u(ks[0], (D, H)), u(ks[1], (D, H)), u(ks[2], (D, H))
    w_hr, w_hz, w_hn = u(ks[3], (H, H)), u(ks[4], (H, H)), u(ks[5], (H, H))
    b_ir, b_iz, b_in = u(ks[6], (1, H)), u(ks[7], (1, H)), u(ks[8], (1, H))
    b_hr, b_hz, b_hn = u(ks[9], (1, H)), u(ks[10], (1, H)), u(ks[11], (1, H))
    w_mu, b_mu = u(ks[12], (H, L)), u(ks[13], (1, L))
    w_var, b_var = u(ks[14], (H, L)), u(ks[15], (1, L))

    return {
        "w_ih": jnp.concatenate([w_ir, w_iz, w_in], axis=1),              # (D, 3H)
        "w_hh": jnp.concatenate([w_hr, w_hz, w_hn], axis=1),              # (H, 3H)
        "b_x": jnp.concatenate([b_ir + b_hr, b_iz + b_hz, b_in], axis=1),  # (1, 3H)
        "b_hn": b_hn,                                                     # (1, H)
        "w_head": jnp.concatenate([w_mu, w_var], axis=1),                 # (H, 2L)
        "b_head": jnp.concatenate([b_mu, b_var], axis=1),                 # (1, 2L)
    }


def _reference_forward(x, params):
    """Pure-JAX reference of the same GRU + Linear heads (for sanity check)."""
    B, T, D = x.shape
    H = params["w_hh"].shape[0]
    L = params["w_head"].shape[1] // 2
    h = jnp.zeros((B, H), jnp.float32)
    for t in range(T):
        xt = x[:, t, :]
        xp = xt @ params["w_ih"] + params["b_x"]
        hp = h @ params["w_hh"]
        r = jax.nn.sigmoid(xp[:, :H] + hp[:, :H])
        z = jax.nn.sigmoid(xp[:, H:2 * H] + hp[:, H:2 * H])
        n = jnp.tanh(xp[:, 2 * H:] + r * (hp[:, 2 * H:] + params["b_hn"]))
        h = (1.0 - z) * n + z * h
    out = h @ params["w_head"] + params["b_head"]
    return out[:, :L], out[:, L:]


if __name__ == "__main__":
    B, T, INPUT_DIM, HIDDEN_DIM, LATENT_DIM = 2, 8, 4, 32, 16

    key = jax.random.PRNGKey(0)
    kx, kp = jax.random.split(key)
    x = jax.random.normal(kx, (B, T, INPUT_DIM), jnp.float32)
    params = init_params(kp, INPUT_DIM, HIDDEN_DIM, LATENT_DIM)

    mu, var = encoder_forward(x, params)
    jax.block_until_ready((mu, var))

    mu_ref, var_ref = _reference_forward(x, params)
    assert mu.shape == (B, LATENT_DIM) and var.shape == (B, LATENT_DIM)
    assert jnp.allclose(mu, mu_ref, atol=1e-5), "mu mismatch vs reference"
    assert jnp.allclose(var, var_ref, atol=1e-5), "var mismatch vs reference"

    print("KERNEL_OK")
</pallas_src>

<mosaic_0001>
module attributes {stable_mosaic.version = 11 : i64} {
  func.func @_encoder_kernel(%arg0: memref<8x8x4xf32, #tpu.memory_space<vmem>>, %arg1: memref<4x96xf32, #tpu.memory_space<vmem>>, %arg2: memref<32x96xf32, #tpu.memory_space<vmem>>, %arg3: memref<1x96xf32, #tpu.memory_space<vmem>>, %arg4: memref<1x32xf32, #tpu.memory_space<vmem>>, %arg5: memref<32x32xf32, #tpu.memory_space<vmem>>, %arg6: memref<1x32xf32, #tpu.memory_space<vmem>>, %arg7: memref<8x32xf32, #tpu.memory_space<vmem>>) attributes {dimension_semantics = [], scalar_prefetch = 0 : i64, scratch_operands = 0 : i64, tpu.core_type = #tpu.core_type<tc>} {
    %c0 = arith.constant 0 : index
    %c0_0 = arith.constant 0 : index
    %c0_1 = arith.constant 0 : index
    %0 = vector.load %arg0[%c0, %c0_0, %c0_1] : memref<8x8x4xf32, #tpu.memory_space<vmem>>, vector<8x8x4xf32>
    %1 = vector.shape_cast %0 : vector<8x8x4xf32> to vector<64x4xf32>
    %c0_2 = arith.constant 0 : index
    %c0_3 = arith.constant 0 : index
    %2 = vector.load %arg1[%c0_2, %c0_3] : memref<4x96xf32, #tpu.memory_space<vmem>>, vector<4x96xf32>
    %cst = arith.constant dense<0.000000e+00> : vector<64x96xf32>
    %3 = tpu.matmul %1, %2, %cst {dimension_numbers = #tpu.dot_dimension_numbers<[1], [0], [0], [1], [0, 0, 1, 1], [], []>} : vector<64x4xf32>, vector<4x96xf32>, vector<64x96xf32> -> vector<64x96xf32>
    %c0_4 = arith.constant 0 : index
    %c0_5 = arith.constant 0 : index
    %4 = vector.load %arg3[%c0_4, %c0_5] : memref<1x96xf32, #tpu.memory_space<vmem>>, vector<1x96xf32>
    %5 = vector.broadcast %4 : vector<1x96xf32> to vector<64x96xf32>
    %6 = arith.addf %3, %5 : vector<64x96xf32>
    %7 = vector.shape_cast %6 : vector<64x96xf32> to vector<8x8x96xf32>
    %c0_6 = arith.constant 0 : index
    %c0_7 = arith.constant 0 : index
    %8 = vector.load %arg2[%c0_6, %c0_7] : memref<32x96xf32, #tpu.memory_space<vmem>>, vector<32x96xf32>
    %c0_8 = arith.constant 0 : index
    %c0_9 = arith.constant 0 : index
    %9 = vector.load %arg4[%c0_8, %c0_9] : memref<1x32xf32, #tpu.memory_space<vmem>>, vector<1x32xf32>
    %cst_10 = arith.constant 0.000000e+00 : f32
    %10 = vector.broadcast %cst_10 : f32 to vector<8x32xf32>
    %11 = vector.extract_strided_slice %7 {offsets = [0, 0, 0], sizes = [8, 1, 96], strides = [1, 1, 1]} : vector<8x8x96xf32> to vector<8x1x96xf32>
    %12 = vector.shape_cast %11 : vector<8x1x96xf32> to vector<8x96xf32>
    %cst_11 = arith.constant dense<0.000000e+00> : vector<8x96xf32>
    %13 = tpu.matmul %10, %8, %cst_11 {dimension_numbers = #tpu.dot_dimension_numbers<[1], [0], [0], [1], [0, 0, 1, 1], [], []>} : vector<8x32xf32>, vector<32x96xf32>, vector<8x96xf32> -> vector<8x96xf32>
    %14 = vector.extract_strided_slice %12 {offsets = [0, 0], sizes = [8, 32], strides = [1, 1]} : vector<8x96xf32> to vector<8x32xf32>
    %15 = vector.extract_strided_slice %13 {offsets = [0, 0], sizes = [8, 32], strides = [1, 1]} : vector<8x96xf32> to vector<8x32xf32>
    %16 = arith.addf %14, %15 : vector<8x32xf32>
    %17 = arith.negf %16 : vector<8x32xf32>
    %18 = math.exp %17 : vector<8x32xf32>
    %cst_12 = arith.constant 1.000000e+00 : f32
    %19 = vector.broadcast %cst_12 : f32 to vector<8x32xf32>
    %20 = arith.addf %19, %18 : vector<8x32xf32>
    %21 = arith.divf %19, %20 : vector<8x32xf32>
    %22 = vector.extract_strided_slice %12 {offsets = [0, 32], sizes = [8, 32], strides = [1, 1]} : vector<8x96xf32> to vector<8x32xf32>
    %23 = vector.extract_strided_slice %13 {offsets = [0, 32], sizes = [8, 32], strides = [1, 1]} : vector<8x96xf32> to vector<8x32xf32>
    %24 = arith.addf %22, %23 : vector<8x32xf32>
    %25 = arith.negf %24 : vector<8x32xf32>
    %26 = math.exp %25 : vector<8x32xf32>
    %cst_13 = arith.constant 1.000000e+00 : f32
    %27 = vector.broadcast %cst_13 : f32 to vector<8x32xf32>
    %28 = arith.addf %27, %26 : vector<8x32xf32>
    %29 = arith.divf %27, %28 : vector<8x32xf32>
    %30 = vector.extract_strided_slice %12 {offsets = [0, 64], sizes = [8, 32], strides = [1, 1]} : vector<8x96xf32> to vector<8x32xf32>
    %31 = vector.extract_strided_slice %13 {offsets = [0, 64], sizes = [8, 32], strides = [1, 1]} : vector<8x96xf32> to vector<8x32xf32>
    %32 = vector.broadcast %9 : vector<1x32xf32> to vector<8x32xf32>
    %33 = arith.addf %31, %32 : vector<8x32xf32>
    %34 = arith.mulf %21, %33 : vector<8x32xf32>
    %35 = arith.addf %30, %34 : vector<8x32xf32>
    %36 = math.tanh %35 : vector<8x32xf32>
    %cst_14 = arith.constant 1.000000e+00 : f32
    %37 = vector.broadcast %cst_14 : f32 to vector<8x32xf32>
    %38 = arith.subf %37, %29 : vector<8x32xf32>
    %39 = arith.mulf %38, %36 : vector<8x32xf32>
    %40 = arith.mulf %29, %10 : vector<8x32xf32>
    %41 = arith.addf %39, %40 : vector<8x32xf32>
    %42 = vector.extract_strided_slice %7 {offsets = [0, 1, 0], sizes = [8, 1, 96], strides = [1, 1, 1]} : vector<8x8x96xf32> to vector<8x1x96xf32>
    %43 = vector.shape_cast %42 : vector<8x1x96xf32> to vector<8x96xf32>
    %cst_15 = arith.constant dense<0.000000e+00> : vector<8x96xf32>
    %44 = tpu.matmul %41, %8, %cst_15 {dimension_numbers = #tpu.dot_dimension_numbers<[1], [0], [0], [1], [0, 0, 1, 1], [], []>} : vector<8x32xf32>, vector<32x96xf32>, vector<8x96xf32> -> vector<8x96xf32>
    %45 = vector.extract_strided_slice %43 {offsets = [0, 0], sizes = [8, 32], strides = [1, 1]} : vector<8x96xf32> to vector<8x32xf32>
    %46 = vector.extract_strided_slice %44 {offsets = [0, 0], sizes = [8, 32], strides = [1, 1]} : vector<8x96xf32> to vector<8x32xf32>
    %47 = arith.addf %45, %46 : vector<8x32xf32>
    %48 = arith.negf %47 : vector<8x32xf32>
    %49 = math.exp %48 : vector<8x32xf32>
    %cst_16 = arith.constant 1.000000e+00 : f32
    %50 = vector.broadcast %cst_16 : f32 to vector<8x32xf32>
    %51 = arith.addf %50, %49 : vector<8x32xf32>
    %52 = arith.divf %50, %51 : vector<8x32xf32>
    %53 = vector.extract_strided_slice %43 {offsets = [0, 32], sizes = [8, 32], strides = [1, 1]} : vector<8x96xf32> to vector<8x32xf32>
    %54 = vector.extract_strided_slice %44 {offsets = [0, 32], sizes = [8, 32], strides = [1, 1]} : vector<8x96xf32> to vector<8x32xf32>
    %55 = arith.addf %53, %54 : vector<8x32xf32>
    %56 = arith.negf %55 : vector<8x32xf32>
    %57 = math.exp %56 : vector<8x32xf32>
    %cst_17 = arith.constant 1.000000e+00 : f32
    %58 = vector.broadcast %cst_17 : f32 to vector<8x32xf32>
    %59 = arith.addf %58, %57 : vector<8x32xf32>
    %60 = arith.divf %58, %59 : vector<8x32xf32>
    %61 = vector.extract_strided_slice %43 {offsets = [0, 64], sizes = [8, 32], strides = [1, 1]} : vector<8x96xf32> to vector<8x32xf32>
    %62 = vector.extract_strided_slice %44 {offsets = [0, 64], sizes = [8, 32], strides = [1, 1]} : vector<8x96xf32> to vector<8x32xf32>
    %63 = vector.broadcast %9 : vector<1x32xf32> to vector<8x32xf32>
    %64 = arith.addf %62, %63 : vector<8x32xf32>
    %65 = arith.mulf %52, %64 : vector<8x32xf32>
    %66 = arith.addf %61, %65 : vector<8x32xf32>
    %67 = math.tanh %66 : vector<8x32xf32>
    %cst_18 = arith.constant 1.000000e+00 : f32
    %68 = vector.broadcast %cst_18 : f32 to vector<8x32xf32>
    %69 = arith.subf %68, %60 : vector<8x32xf32>
    %70 = arith.mulf %69, %67 : vector<8x32xf32>
    %71 = arith.mulf %60, %41 : vector<8x32xf32>
    %72 = arith.addf %70, %71 : vector<8x32xf32>
    %73 = vector.extract_strided_slice %7 {offsets = [0, 2, 0], sizes = [8, 1, 96], strides = [1, 1, 1]} : vector<8x8x96xf32> to vector<8x1x96xf32>
    %74 = vector.shape_cast %73 : vector<8x1x96xf32> to vector<8x96xf32>
    %cst_19 = arith.constant dense<0.000000e+00> : vector<8x96xf32>
    %75 = tpu.matmul %72, %8, %cst_19 {dimension_numbers = #tpu.dot_dimension_numbers<[1], [0], [0], [1], [0, 0, 1, 1], [], []>} : vector<8x32xf32>, vector<32x96xf32>, vector<8x96xf32> -> vector<8x96xf32>
    %76 = vector.extract_strided_slice %74 {offsets = [0, 0], sizes = [8, 32], strides = [1, 1]} : vector<8x96xf32> to vector<8x32xf32>
    %77 = vector.extract_strided_slice %75 {offsets = [0, 0], sizes = [8, 32], strides = [1, 1]} : vector<8x96xf32> to vector<8x32xf32>
    %78 = arith.addf %76, %77 : vector<8x32xf32>
    %79 = arith.negf %78 : vector<8x32xf32>
    %80 = math.exp %79 : vector<8x32xf32>
    %cst_20 = arith.constant 1.000000e+00 : f32
    %81 = vector.broadcast %cst_20 : f32 to vector<8x32xf32>
    %82 = arith.addf %81, %80 : vector<8x32xf32>
    %83 = arith.divf %81, %82 : vector<8x32xf32>
    %84 = vector.extract_strided_slice %74 {offsets = [0, 32], sizes = [8, 32], strides = [1, 1]} : vector<8x96xf32> to vector<8x32xf32>
    %85 = vector.extract_strided_slice %75 {offsets = [0, 32], sizes = [8, 32], strides = [1, 1]} : vector<8x96xf32> to vector<8x32xf32>
    %86 = arith.addf %84, %85 : vector<8x32xf32>
    %87 = arith.negf %86 : vector<8x32xf32>
    %88 = math.exp %87 : vector<8x32xf32>
    %cst_21 = arith.constant 1.000000e+00 : f32
    %89 = vector.broadcast %cst_21 : f32 to vector<8x32xf32>
    %90 = arith.addf %89, %88 : vector<8x32xf32>
    %91 = arith.divf %89, %90 : vector<8x32xf32>
    %92 = vector.extract_strided_slice %74 {offsets = [0, 64], sizes = [8, 32], strides = [1, 1]} : vector<8x96xf32> to vector<8x32xf32>
    %93 = vector.extract_strided_slice %75 {offsets = [0, 64], sizes = [8, 32], strides = [1, 1]} : vector<8x96xf32> to vector<8x32xf32>
    %94 = vector.broadcast %9 : vector<1x32xf32> to vector<8x32xf32>
    %95 = arith.addf %93, %94 : vector<8x32xf32>
    %96 = arith.mulf %83, %95 : vector<8x32xf32>
    %97 = arith.addf %92, %96 : vector<8x32xf32>
    %98 = math.tanh %97 : vector<8x32xf32>
    %cst_22 = arith.constant 1.000000e+00 : f32
    %99 = vector.broadcast %cst_22 : f32 to vector<8x32xf32>
    %100 = arith.subf %99, %91 : vector<8x32xf32>
    %101 = arith.mulf %100, %98 : vector<8x32xf32>
    %102 = arith.mulf %91, %72 : vector<8x32xf32>
    %103 = arith.addf %101, %102 : vector<8x32xf32>
    %104 = vector.extract_strided_slice %7 {offsets = [0, 3, 0], sizes = [8, 1, 96], strides = [1, 1, 1]} : vector<8x8x96xf32> to vector<8x1x96xf32>
    %105 = vector.shape_cast %104 : vector<8x1x96xf32> to vector<8x96xf32>
    %cst_23 = arith.constant dense<0.000000e+00> : vector<8x96xf32>
    %106 = tpu.matmul %103, %8, %cst_23 {dimension_numbers = #tpu.dot_dimension_numbers<[1], [0], [0], [1], [0, 0, 1, 1], [], []>} : vector<8x32xf32>, vector<32x96xf32>, vector<8x96xf32> -> vector<8x96xf32>
    %107 = vector.extract_strided_slice %105 {offsets = [0, 0], sizes = [8, 32], strides = [1, 1]} : vector<8x96xf32> to vector<8x32xf32>
    %108 = vector.extract_strided_slice %106 {offsets = [0, 0], sizes = [8, 32], strides = [1, 1]} : vector<8x96xf32> to vector<8x32xf32>
    %109 = arith.addf %107, %108 : vector<8x32xf32>
    %110 = arith.negf %109 : vector<8x32xf32>
    %111 = math.exp %110 : vector<8x32xf32>
    %cst_24 = arith.constant 1.000000e+00 : f32
    %112 = vector.broadcast %cst_24 : f32 to vector<8x32xf32>
    %113 = arith.addf %112, %111 : vector<8x32xf32>
    %114 = arith.divf %112, %113 : vector<8x32xf32>
    %115 = vector.extract_strided_slice %105 {offsets = [0, 32], sizes = [8, 32], strides = [1, 1]} : vector<8x96xf32> to vector<8x32xf32>
    %116 = vector.extract_strided_slice %106 {offsets = [0, 32], sizes = [8, 32], strides = [1, 1]} : vector<8x96xf32> to vector<8x32xf32>
    %117 = arith.addf %115, %116 : vector<8x32xf32>
    %118 = arith.negf %117 : vector<8x32xf32>
    %119 = math.exp %118 : vector<8x32xf32>
    %cst_25 = arith.constant 1.000000e+00 : f32
    %120 = vector.broadcast %cst_25 : f32 to vector<8x32xf32>
    %121 = arith.addf %120, %119 : vector<8x32xf32>
    %122 = arith.divf %120, %121 : vector<8x32xf32>
    %123 = vector.extract_strided_slice %105 {offsets = [0, 64], sizes = [8, 32], strides = [1, 1]} : vector<8x96xf32> to vector<8x32xf32>
    %124 = vector.extract_strided_slice %106 {offsets = [0, 64], sizes = [8, 32], strides = [1, 1]} : vector<8x96xf32> to vector<8x32xf32>
    %125 = vector.broadcast %9 : vector<1x32xf32> to vector<8x32xf32>
    %126 = arith.addf %124, %125 : vector<8x32xf32>
    %127 = arith.mulf %114, %126 : vector<8x32xf32>
    %128 = arith.addf %123, %127 : vector<8x32xf32>
    %129 = math.tanh %128 : vector<8x32xf32>
    %cst_26 = arith.constant 1.000000e+00 : f32
    %130 = vector.broadcast %cst_26 : f32 to vector<8x32xf32>
    %131 = arith.subf %130, %122 : vector<8x32xf32>
    %132 = arith.mulf %131, %129 : vector<8x32xf32>
    %133 = arith.mulf %122, %103 : vector<8x32xf32>
    %134 = arith.addf %132, %133 : vector<8x32xf32>
    %135 = vector.extract_strided_slice %7 {offsets = [0, 4, 0], sizes = [8, 1, 96], strides = [1, 1, 1]} : vector<8x8x96xf32> to vector<8x1x96xf32>
    %136 = vector.shape_cast %135 : vector<8x1x96xf32> to vector<8x96xf32>
    %cst_27 = arith.constant dense<0.000000e+00> : vector<8x96xf32>
    %137 = tpu.matmul %134, %8, %cst_27 {dimension_numbers = #tpu.dot_dimension_numbers<[1], [0], [0], [1], [0, 0, 1, 1], [], []>} : vector<8x32xf32>, vector<32x96xf32>, vector<8x96xf32> -> vector<8x96xf32>
    %138 = vector.extract_strided_slice %136 {offsets = [0, 0], sizes = [8, 32], strides = [1, 1]} : vector<8x96xf32> to vector<8x32xf32>
    %139 = vector.extract_strided_slice %137 {offsets = [0, 0], sizes = [8, 32], strides = [1, 1]} : vector<8x96xf32> to vector<8x32xf32>
    %140 = arith.addf %138, %139 : vector<8x32xf32>
    %141 = arith.negf %140 : vector<8x32xf32>
    %142 = math.exp %141 : vector<8x32xf32>
    %cst_28 = arith.constant 1.000000e+00 : f32
    %143 = vector.broadcast %cst_28 : f32 to vector<8x32xf32>
    %144 = arith.addf %143, %142 : vector<8x32xf32>
    %145 = arith.divf %143, %144 : vector<8x32xf32>
    %146 = vector.extract_strided_slice %136 {offsets = [0, 32], sizes = [8, 32], strides = [1, 1]} : vector<8x96xf32> to vector<8x32xf32>
    %147 = vector.extract_strided_slice %137 {offsets = [0, 32], sizes = [8, 32], strides = [1, 1]} : vector<8x96xf32> to vector<8x32xf32>
    %148 = arith.addf %146, %147 : vector<8x32xf32>
    %149 = arith.negf %148 : vector<8x32xf32>
    %150 = math.exp %149 : vector<8x32xf32>
    %cst_29 = arith.constant 1.000000e+00 : f32
    %151 = vector.broadcast %cst_29 : f32 to vector<8x32xf32>
    %152 = arith.addf %151, %150 : vector<8x32xf32>
    %153 = arith.divf %151, %152 : vector<8x32xf32>
    %154 = vector.extract_strided_slice %136 {offsets = [0, 64], sizes = [8, 32], strides = [1, 1]} : vector<8x96xf32> to vector<8x32xf32>
    %155 = vector.extract_strided_slice %137 {offsets = [0, 64], sizes = [8, 32], strides = [1, 1]} : vector<8x96xf32> to vector<8x32xf32>
    %156 = vector.broadcast %9 : vector<1x32xf32> to vector<8x32xf32>
    %157 = arith.addf %155, %156 : vector<8x32xf32>
    %158 = arith.mulf %145, %157 : vector<8x32xf32>
    %159 = arith.addf %154, %158 : vector<8x32xf32>
    %160 = math.tanh %159 : vector<8x32xf32>
    %cst_30 = arith.constant 1.000000e+00 : f32
    %161 = vector.broadcast %cst_30 : f32 to vector<8x32xf32>
    %162 = arith.subf %161, %153 : vector<8x32xf32>
    %163 = arith.mulf %162, %160 : vector<8x32xf32>
    %164 = arith.mulf %153, %134 : vector<8x32xf32>
    %165 = arith.addf %163, %164 : vector<8x32xf32>
    %166 = vector.extract_strided_slice %7 {offsets = [0, 5, 0], sizes = [8, 1, 96], strides = [1, 1, 1]} : vector<8x8x96xf32> to vector<8x1x96xf32>
    %167 = vector.shape_cast %166 : vector<8x1x96xf32> to vector<8x96xf32>
    %cst_31 = arith.constant dense<0.000000e+00> : vector<8x96xf32>
    %168 = tpu.matmul %165, %8, %cst_31 {dimension_numbers = #tpu.dot_dimension_numbers<[1], [0], [0], [1], [0, 0, 1, 1], [], []>} : vector<8x32xf32>, vector<32x96xf32>, vector<8x96xf32> -> vector<8x96xf32>
    %169 = vector.extract_strided_slice %167 {offsets = [0, 0], sizes = [8, 32], strides = [1, 1]} : vector<8x96xf32> to vector<8x32xf32>
    %170 = vector.extract_strided_slice %168 {offsets = [0, 0], sizes = [8, 32], strides = [1, 1]} : vector<8x96xf32> to vector<8x32xf32>
    %171 = arith.addf %169, %170 : vector<8x32xf32>
    %172 = arith.negf %171 : vector<8x32xf32>
    %173 = math.exp %172 : vector<8x32xf32>
    %cst_32 = arith.constant 1.000000e+00 : f32
    %174 = vector.broadcast %cst_32 : f32 to vector<8x32xf32>
    %175 = arith.addf %174, %173 : vector<8x32xf32>
    %176 = arith.divf %174, %175 : vector<8x32xf32>
    %177 = vector.extract_strided_slice %167 {offsets = [0, 32], sizes = [8, 32], strides = [1, 1]} : vector<8x96xf32> to vector<8x32xf32>
    %178 = vector.extract_strided_slice %168 {offsets = [0, 32], sizes = [8, 32], strides = [1, 1]} : vector<8x96xf32> to vector<8x32xf32>
    %179 = arith.addf %177, %178 : vector<8x32xf32>
    %180 = arith.negf %179 : vector<8x32xf32>
    %181 = math.exp %180 : vector<8x32xf32>
    %cst_33 = arith.constant 1.000000e+00 : f32
    %182 = vector.broadcast %cst_33 : f32 to vector<8x32xf32>
    %183 = arith.addf %182, %181 : vector<8x32xf32>
    %184 = arith.divf %182, %183 : vector<8x32xf32>
    %185 = vector.extract_strided_slice %167 {offsets = [0, 64], sizes = [8, 32], strides = [1, 1]} : vector<8x96xf32> to vector<8x32xf32>
    %186 = vector.extract_strided_slice %168 {offsets = [0, 64], sizes = [8, 32], strides = [1, 1]} : vector<8x96xf32> to vector<8x32xf32>
    %187 = vector.broadcast %9 : vector<1x32xf32> to vector<8x32xf32>
    %188 = arith.addf %186, %187 : vector<8x32xf32>
    %189 = arith.mulf %176, %188 : vector<8x32xf32>
    %190 = arith.addf %185, %189 : vector<8x32xf32>
    %191 = math.tanh %190 : vector<8x32xf32>
    %cst_34 = arith.constant 1.000000e+00 : f32
    %192 = vector.broadcast %cst_34 : f32 to vector<8x32xf32>
    %193 = arith.subf %192, %184 : vector<8x32xf32>
    %194 = arith.mulf %193, %191 : vector<8x32xf32>
    %195 = arith.mulf %184, %165 : vector<8x32xf32>
    %196 = arith.addf %194, %195 : vector<8x32xf32>
    %197 = vector.extract_strided_slice %7 {offsets = [0, 6, 0], sizes = [8, 1, 96], strides = [1, 1, 1]} : vector<8x8x96xf32> to vector<8x1x96xf32>
    %198 = vector.shape_cast %197 : vector<8x1x96xf32> to vector<8x96xf32>
    %cst_35 = arith.constant dense<0.000000e+00> : vector<8x96xf32>
    %199 = tpu.matmul %196, %8, %cst_35 {dimension_numbers = #tpu.dot_dimension_numbers<[1], [0], [0], [1], [0, 0, 1, 1], [], []>} : vector<8x32xf32>, vector<32x96xf32>, vector<8x96xf32> -> vector<8x96xf32>
    %200 = vector.extract_strided_slice %198 {offsets = [0, 0], sizes = [8, 32], strides = [1, 1]} : vector<8x96xf32> to vector<8x32xf32>
    %201 = vector.extract_strided_slice %199 {offsets = [0, 0], sizes = [8, 32], strides = [1, 1]} : vector<8x96xf32> to vector<8x32xf32>
    %202 = arith.addf %200, %201 : vector<8x32xf32>
    %203 = arith.negf %202 : vector<8x32xf32>
    %204 = math.exp %203 : vector<8x32xf32>
    %cst_36 = arith.constant 1.000000e+00 : f32
    %205 = vector.broadcast %cst_36 : f32 to vector<8x32xf32>
    %206 = arith.addf %205, %204 : vector<8x32xf32>
    %207 = arith.divf %205, %206 : vector<8x32xf32>
    %208 = vector.extract_strided_slice %198 {offsets = [0, 32], sizes = [8, 32], strides = [1, 1]} : vector<8x96xf32> to vector<8x32xf32>
    %209 = vector.extract_strided_slice %199 {offsets = [0, 32], sizes = [8, 32], strides = [1, 1]} : vector<8x96xf32> to vector<8x32xf32>
    %210 = arith.addf %208, %209 : vector<8x32xf32>
    %211 = arith.negf %210 : vector<8x32xf32>
    %212 = math.exp %211 : vector<8x32xf32>
    %cst_37 = arith.constant 1.000000e+00 : f32
    %213 = vector.broadcast %cst_37 : f32 to vector<8x32xf32>
    %214 = arith.addf %213, %212 : vector<8x32xf32>
    %215 = arith.divf %213, %214 : vector<8x32xf32>
    %216 = vector.extract_strided_slice %198 {offsets = [0, 64], sizes = [8, 32], strides = [1, 1]} : vector<8x96xf32> to vector<8x32xf32>
    %217 = vector.extract_strided_slice %199 {offsets = [0, 64], sizes = [8, 32], strides = [1, 1]} : vector<8x96xf32> to vector<8x32xf32>
    %218 = vector.broadcast %9 : vector<1x32xf32> to vector<8x32xf32>
    %219 = arith.addf %217, %218 : vector<8x32xf32>
    %220 = arith.mulf %207, %219 : vector<8x32xf32>
    %221 = arith.addf %216, %220 : vector<8x32xf32>
    %222 = math.tanh %221 : vector<8x32xf32>
    %cst_38 = arith.constant 1.000000e+00 : f32
    %223 = vector.broadcast %cst_38 : f32 to vector<8x32xf32>
    %224 = arith.subf %223, %215 : vector<8x32xf32>
    %225 = arith.mulf %224, %222 : vector<8x32xf32>
    %226 = arith.mulf %215, %196 : vector<8x32xf32>
    %227 = arith.addf %225, %226 : vector<8x32xf32>
    %228 = vector.extract_strided_slice %7 {offsets = [0, 7, 0], sizes = [8, 1, 96], strides = [1, 1, 1]} : vector<8x8x96xf32> to vector<8x1x96xf32>
    %229 = vector.shape_cast %228 : vector<8x1x96xf32> to vector<8x96xf32>
    %cst_39 = arith.constant dense<0.000000e+00> : vector<8x96xf32>
    %230 = tpu.matmul %227, %8, %cst_39 {dimension_numbers = #tpu.dot_dimension_numbers<[1], [0], [0], [1], [0, 0, 1, 1], [], []>} : vector<8x32xf32>, vector<32x96xf32>, vector<8x96xf32> -> vector<8x96xf32>
    %231 = vector.extract_strided_slice %229 {offsets = [0, 0], sizes = [8, 32], strides = [1, 1]} : vector<8x96xf32> to vector<8x32xf32>
    %232 = vector.extract_strided_slice %230 {offsets = [0, 0], sizes = [8, 32], strides = [1, 1]} : vector<8x96xf32> to vector<8x32xf32>
    %233 = arith.addf %231, %232 : vector<8x32xf32>
    %234 = arith.negf %233 : vector<8x32xf32>
    %235 = math.exp %234 : vector<8x32xf32>
    %cst_40 = arith.constant 1.000000e+00 : f32
    %236 = vector.broadcast %cst_40 : f32 to vector<8x32xf32>
    %237 = arith.addf %236, %235 : vector<8x32xf32>
    %238 = arith.divf %236, %237 : vector<8x32xf32>
    %239 = vector.extract_strided_slice %229 {offsets = [0, 32], sizes = [8, 32], strides = [1, 1]} : vector<8x96xf32> to vector<8x32xf32>
    %240 = vector.extract_strided_slice %230 {offsets = [0, 32], sizes = [8, 32], strides = [1, 1]} : vector<8x96xf32> to vector<8x32xf32>
    %241 = arith.addf %239, %240 : vector<8x32xf32>
    %242 = arith.negf %241 : vector<8x32xf32>
    %243 = math.exp %242 : vector<8x32xf32>
    %cst_41 = arith.constant 1.000000e+00 : f32
    %244 = vector.broadcast %cst_41 : f32 to vector<8x32xf32>
    %245 = arith.addf %244, %243 : vector<8x32xf32>
    %246 = arith.divf %244, %245 : vector<8x32xf32>
    %247 = vector.extract_strided_slice %229 {offsets = [0, 64], sizes = [8, 32], strides = [1, 1]} : vector<8x96xf32> to vector<8x32xf32>
    %248 = vector.extract_strided_slice %230 {offsets = [0, 64], sizes = [8, 32], strides = [1, 1]} : vector<8x96xf32> to vector<8x32xf32>
    %249 = vector.broadcast %9 : vector<1x32xf32> to vector<8x32xf32>
    %250 = arith.addf %248, %249 : vector<8x32xf32>
    %251 = arith.mulf %238, %250 : vector<8x32xf32>
    %252 = arith.addf %247, %251 : vector<8x32xf32>
    %253 = math.tanh %252 : vector<8x32xf32>
    %cst_42 = arith.constant 1.000000e+00 : f32
    %254 = vector.broadcast %cst_42 : f32 to vector<8x32xf32>
    %255 = arith.subf %254, %246 : vector<8x32xf32>
    %256 = arith.mulf %255, %253 : vector<8x32xf32>
    %257 = arith.mulf %246, %227 : vector<8x32xf32>
    %258 = arith.addf %256, %257 : vector<8x32xf32>
    %c0_43 = arith.constant 0 : index
    %c0_44 = arith.constant 0 : index
    %259 = vector.load %arg5[%c0_43, %c0_44] : memref<32x32xf32, #tpu.memory_space<vmem>>, vector<32x32xf32>
    %cst_45 = arith.constant dense<0.000000e+00> : vector<8x32xf32>
    %260 = tpu.matmul %258, %259, %cst_45 {dimension_numbers = #tpu.dot_dimension_numbers<[1], [0], [0], [1], [0, 0, 1, 1], [], []>} : vector<8x32xf32>, vector<32x32xf32>, vector<8x32xf32> -> vector<8x32xf32>
    %c0_46 = arith.constant 0 : index
    %c0_47 = arith.constant 0 : index
    %261 = vector.load %arg6[%c0_46, %c0_47] : memref<1x32xf32, #tpu.memory_space<vmem>>, vector<1x32xf32>
    %262 = vector.broadcast %261 : vector<1x32xf32> to vector<8x32xf32>
    %263 = arith.addf %260, %262 : vector<8x32xf32>
    %c0_48 = arith.constant 0 : index
    %c0_49 = arith.constant 0 : index
    %264 = vector.load %arg7[%c0_48, %c0_49] : memref<8x32xf32, #tpu.memory_space<vmem>>, vector<8x32xf32>
    tpu.vector_store %arg7[%c0_48, %c0_49], %263 {strides = array<i32>} : memref<8x32xf32, #tpu.memory_space<vmem>>, vector<8x32xf32>,
    return
  }
}

</mosaic_0001>

<llo_original>
// kernel: tpu_custom_call.1
$region0: #{tpu_custom_call.1}
  #allocation0 [shape = 'u32[]', space=smem, size = 0x4, offset = 0x4, fixed_abs, tag = 'smem constant byte address 0x4 - core index']
  #allocation1 [shape = 'u32[144,128]{1,0:T(1,128)}', space=vmem, size = 0x12000, scoped, tag = 'internal scratch']
  %s0 = inlined_call_operand.vmem [shape: f32[8,8,4], index: 0, kind: input, shape index: {}]
  %s1 = inlined_call_operand.vmem [shape: f32[4,96], index: 1, kind: input, shape index: {}]
  %s2 = inlined_call_operand.vmem [shape: f32[32,96], index: 2, kind: input, shape index: {}]
  %s3 = inlined_call_operand.vmem [shape: f32[1,96], index: 3, kind: input, shape index: {}]
  %s4 = inlined_call_operand.vmem [shape: f32[1,32], index: 4, kind: input, shape index: {}]
  %s5 = inlined_call_operand.vmem [shape: f32[32,32], index: 5, kind: input, shape index: {}]
  %s6 = inlined_call_operand.vmem [shape: f32[1,32], index: 6, kind: input, shape index: {}]
  %s7 = inlined_call_operand.hbm [shape: f32[8,32], index: 7, kind: output, shape index: {}]
  %s8 = sld [smem:[#allocation0]]
  $region38: #{tpu_custom_call.1} parent=0
    _
  %s10 = ssub.s32 1, %s8
  %s11 = scalar_select 0, %s10, %s8
  $region1: #{tpu_custom_call.1} parent=0
    #allocation2 [shape = 'u8[4096]{0}', space=vmem, size = 0x1000, scoped, tag = 'output window, operand 0, single buffered']
    #allocation3 [shape = 's32[1]{0}', space=sflag, size = 0x4, scoped, tag = 'scoped memory for tpu_custom_call.1']
    %12 = vsyncpa [#allocation3], 0
    // Predicated region
    $region2: #{tpu_custom_call.1} parent=1 // pred_check
      _
    $region3: #{tpu_custom_call.1} parent=1 // pred_check_branch
      %14 = sbr.rel (0) target = $region5
    $region4: #{tpu_custom_call.1} parent=1 // pred_region
      _
    $region5: #{tpu_custom_call.1} parent=1 // pred_fallthru
      _
    // Predicated region
    $region6: #{tpu_custom_call.1} parent=1 // pred_check
      _
    $region7: #{tpu_custom_call.1} parent=1 // pred_check_branch
      %16 = sbr.rel (0) target = $region9
    $region8: #{tpu_custom_call.1} parent=1 // pred_region
      _
    $region9: #{tpu_custom_call.1} parent=1 // pred_fallthru
      _
    // Predicated region
    $region10: #{tpu_custom_call.1} parent=1 // pred_check
      _
    $region11: #{tpu_custom_call.1} parent=1 // pred_check_branch
      %18 = sbr.rel (0) target = $region13
    $region12: #{tpu_custom_call.1} parent=1 // pred_region
      _
    $region13: #{tpu_custom_call.1} parent=1 // pred_fallthru
      _
    // Predicated region
    $region14: #{tpu_custom_call.1} parent=1 // pred_check
      _
    $region15: #{tpu_custom_call.1} parent=1 // pred_check_branch
      %20 = sbr.rel (0) target = $region17
    $region16: #{tpu_custom_call.1} parent=1 // pred_region
      _
    $region17: #{tpu_custom_call.1} parent=1 // pred_fallthru
      _
    // Predicated region
    $region18: #{tpu_custom_call.1} parent=1 // pred_check
      _
    $region19: #{tpu_custom_call.1} parent=1 // pred_check_branch
      %22 = sbr.rel (0) target = $region21
    $region20: #{tpu_custom_call.1} parent=1 // pred_region
      _
    $region21: #{tpu_custom_call.1} parent=1 // pred_fallthru
      _
    // Predicated region
    $region22: #{tpu_custom_call.1} parent=1 // pred_check
      _
    $region23: #{tpu_custom_call.1} parent=1 // pred_check_branch
      %24 = sbr.rel (0) target = $region25
    $region24: #{tpu_custom_call.1} parent=1 // pred_region
      _
    $region25: #{tpu_custom_call.1} parent=1 // pred_fallthru
      _
    // Predicated region
    $region26: #{tpu_custom_call.1} parent=1 // pred_check
      _
    $region27: #{tpu_custom_call.1} parent=1 // pred_check_branch
      %26 = sbr.rel (0) target = $region29
    $region28: #{tpu_custom_call.1} parent=1 // pred_region
      _
    $region29: #{tpu_custom_call.1} parent=1 // pred_fallthru
      _
    %v27 = vld [vmem:[%s0] sm:$0xff]
    %v28 = vld [vmem:[%s0 + $0x8] sm:$0xff]
    %v29 = vld [vmem:[%s0 + $0x10] sm:$0xff]
    %v30 = vld [vmem:[%s0 + $0x18] sm:$0xff]
    %v31 = vld [vmem:[%s0 + $0x20] sm:$0xff]
    %v32 = vld [vmem:[%s0 + $0x28] sm:$0xff]
    %v33 = vld [vmem:[%s0 + $0x30] sm:$0xff]
    %v34 = vld [vmem:[%s0 + $0x38] sm:$0xff]
    %v35 = vld [vmem:[%s1] sm:$0xf]
    %v36 = vld [vmem:[%s3] sm:$0x1]
    %v38 = vlaneseq
    %v39 = vshrl.u32 %v38, 7
    %v40 = vsub.s32 0, %v39
    %v41 = vrot.slane %v36, %v40
    %vm43 = vcmask 31744
    %v45 = vsel %vm43, %v27, 0
    %v48 = vsel %vm43, %v28, 0
    %v51 = vsel %vm43, %v29, 0
    %v54 = vsel %vm43, %v30, 0
    %v57 = vsel %vm43, %v31, 0
    %v60 = vsel %vm43, %v32, 0
    %v63 = vsel %vm43, %v33, 0
    %v66 = vsel %vm43, %v34, 0
    %vm68 = vcmask 1043456
    %v70 = vsel %vm68, %v35, 0
    %72 = vmatprep.subr.mxu0 0.0
    %73 = vmatpush1.msra.mxu0 0.0
    %74 = vmatprep.subr.mxu0 0.0
    %75 = vmatpush1.msra.mxu0 0.0
    %76 = vmatprep.subr.mxu0 0.0
    %77 = vmatpush1.msra.mxu0 0.0
    %78 = vmatprep.subr.mxu0 0.0
    %79 = vmatpush1.msra.mxu0 0.0
    %80 = vmatprep.subr.mxu0 0.0
    %81 = vmatpush1.msra.mxu0 0.0
    %82 = vmatprep.subr.mxu0 0.0
    %83 = vmatpush1.msra.mxu0 0.0
    %84 = vmatprep.subr.mxu0 0.0
    %85 = vmatpush1.msra.mxu0 0.0
    %86 = vmatprep.subr.mxu0 0.0
    %87 = vmatpush1.msra.mxu0 0.0
    %88 = vmatprep.subr.mxu0 0.0
    %89 = vmatpush1.msra.mxu0 0.0
    %90 = vmatprep.subr.mxu0 0.0
    %91 = vmatpush1.msra.mxu0 0.0
    %92 = vmatprep.subr.mxu0 0.0
    %93 = vmatpush1.msra.mxu0 0.0
    %94 = vmatprep.subr.mxu0 0.0
    %95 = vmatpush1.msra.mxu0 0.0
    %96 = vmatprep.subr.mxu0 0.0
    %97 = vmatpush1.msra.mxu0 0.0
    %98 = vmatprep.subr.mxu0 0.0
    %99 = vmatpush1.msra.mxu0 0.0
    %100 = vmatprep.subr.mxu0 0.0
    %101 = vmatpush1.msra.mxu0 0.0
    %102 = vmatprep.subr.mxu0 0.0
    %103 = vmatpush1.msra.mxu0 %v70
    %104 = vmatprep.subr.mxu0 0.0
    %105 = vmatpush2.msra.mxu0 0.0
    %106 = vmatprep.subr.mxu0 0.0
    %107 = vmatpush2.msra.mxu0 0.0
    %108 = vmatprep.subr.mxu0 0.0
    %109 = vmatpush2.msra.mxu0 0.0
    %110 = vmatprep.subr.mxu0 0.0
    %111 = vmatpush2.msra.mxu0 0.0
    %112 = vmatprep.subr.mxu0 0.0
    %113 = vmatpush2.msra.mxu0 0.0
    %114 = vmatprep.subr.mxu0 0.0
    %115 = vmatpush2.msra.mxu0 0.0
    %116 = vmatprep.subr.mxu0 0.0
    %117 = vmatpush2.msra.mxu0 0.0
    %118 = vmatprep.subr.mxu0 0.0
    %119 = vmatpush2.msra.mxu0 0.0
    %120 = vmatprep.subr.mxu0 0.0
    %121 = vmatpush2.msra.mxu0 0.0
    %122 = vmatprep.subr.mxu0 0.0
    %123 = vmatpush2.msra.mxu0 0.0
    %124 = vmatprep.subr.mxu0 0.0
    %125 = vmatpush2.msra.mxu0 0.0
    %126 = vmatprep.subr.mxu0 0.0
    %127 = vmatpush2.msra.mxu0 0.0
    %128 = vmatprep.subr.mxu0 0.0
    %129 = vmatpush2.msra.mxu0 0.0
    %130 = vmatprep.subr.mxu0 0.0
    %131 = vmatpush2.msra.mxu0 0.0
    %132 = vmatprep.subr.mxu0 0.0
    %133 = vmatpush2.msra.mxu0 0.0
    %134 = vmatprep.subr.mxu0 0.0
    %135 = vmatpush2.msra.mxu0 0.0
    %136 = vmatprep.mubr.f32.mxu0 0.0
    %137 = vmatmul.mubr.f32.gmra.mxu0 %v45
    %v138 = vpop.f32.mrf.mxu0
    %v139 = vadd.f32 %v41, %v138
    %v140 = vpop.f32.mrf.mxu0
    %141 = vmatprep.mubr.f32.mxu0 0.0
    %142 = vmatmul.mubr.f32.gmra.mxu0 %v48
    %v143 = vpop.f32.mrf.mxu0
    %v144 = vadd.f32 %v41, %v143
    %v145 = vpop.f32.mrf.mxu0
    %146 = vmatprep.mubr.f32.mxu0 0.0
    %147 = vmatmul.mubr.f32.gmra.mxu0 %v51
    %v148 = vpop.f32.mrf.mxu0
    %v149 = vadd.f32 %v41, %v148
    %v150 = vpop.f32.mrf.mxu0
    %151 = vmatprep.mubr.f32.mxu0 0.0
    %152 = vmatmul.mubr.f32.gmra.mxu0 %v54
    %v153 = vpop.f32.mrf.mxu0
    %v154 = vadd.f32 %v41, %v153
    %v155 = vpop.f32.mrf.mxu0
    %156 = vmatprep.mubr.f32.mxu0 0.0
    %157 = vmatmul.mubr.f32.gmra.mxu0 %v57
    %v158 = vpop.f32.mrf.mxu0
    %v159 = vadd.f32 %v41, %v158
    %v160 = vpop.f32.mrf.mxu0
    %161 = vmatprep.mubr.f32.mxu0 0.0
    %162 = vmatmul.mubr.f32.gmra.mxu0 %v60
    %v163 = vpop.f32.mrf.mxu0
    %v164 = vadd.f32 %v41, %v163
    %v165 = vpop.f32.mrf.mxu0
    %166 = vmatprep.mubr.f32.mxu0 0.0
    %167 = vmatmul.mubr.f32.gmra.mxu0 %v63
    %v168 = vpop.f32.mrf.mxu0
    %v169 = vadd.f32 %v41, %v168
    %v170 = vpop.f32.mrf.mxu0
    %171 = vmatprep.mubr.f32.mxu0 0.0
    %172 = vmatmul.mubr.f32.gmra.mxu0 %v66
    %v173 = vpop.f32.mrf.mxu0
    %v174 = vadd.f32 %v41, %v173
    %v175 = vpop.f32.mrf.mxu0
    %176 = vdwg.mxu0
    %v177 = vld [vmem:[%s2] sm:$0xff]
    %v178 = vld [vmem:[%s2 + $0x8] sm:$0xff]
    %v179 = vld [vmem:[%s2 + $0x10] sm:$0xff]
    %v180 = vld [vmem:[%s2 + $0x18] sm:$0xff]
    %v181 = vld [vmem:[%s4] sm:$0x1]
    %vm182 = vcmask 261120
    %v184 = vsel %vm182, 0.0, 0
    %186 = vmatprep.subr.mxu0 0.0
    %187 = vmatpush1.msra.mxu0 0.0
    %188 = vmatprep.subr.mxu0 0.0
    %189 = vmatpush1.msra.mxu0 0.0
    %190 = vmatprep.subr.mxu0 0.0
    %191 = vmatpush1.msra.mxu0 0.0
    %192 = vmatprep.subr.mxu0 0.0
    %193 = vmatpush1.msra.mxu0 0.0
    %194 = vmatprep.subr.mxu0 0.0
    %195 = vmatpush1.msra.mxu0 0.0
    %196 = vmatprep.subr.mxu0 0.0
    %197 = vmatpush1.msra.mxu0 0.0
    %198 = vmatprep.subr.mxu0 0.0
    %199 = vmatpush1.msra.mxu0 0.0
    %200 = vmatprep.subr.mxu0 0.0
    %201 = vmatpush1.msra.mxu0 0.0
    %202 = vmatprep.subr.mxu0 0.0
    %203 = vmatpush1.msra.mxu0 0.0
    %204 = vmatprep.subr.mxu0 0.0
    %205 = vmatpush1.msra.mxu0 0.0
    %206 = vmatprep.subr.mxu0 0.0
    %207 = vmatpush1.msra.mxu0 0.0
    %208 = vmatprep.subr.mxu0 0.0
    %209 = vmatpush1.msra.mxu0 0.0
    %210 = vmatprep.subr.mxu0 0.0
    %211 = vmatpush1.msra.mxu0 %v180
    %212 = vmatprep.subr.mxu0 0.0
    %213 = vmatpush1.msra.mxu0 %v179
    %214 = vmatprep.subr.mxu0 0.0
    %215 = vmatpush1.msra.mxu0 %v178
    %216 = vmatprep.subr.mxu0 0.0
    %217 = vmatpush1.msra.mxu0 %v177
    %218 = vmatprep.subr.mxu0 0.0
    %219 = vmatpush2.msra.mxu0 0.0
    %220 = vmatprep.subr.mxu0 0.0
    %221 = vmatpush2.msra.mxu0 0.0
    %222 = vmatprep.subr.mxu0 0.0
    %223 = vmatpush2.msra.mxu0 0.0
    %224 = vmatprep.subr.mxu0 0.0
    %225 = vmatpush2.msra.mxu0 0.0
    %226 = vmatprep.subr.mxu0 0.0
    %227 = vmatpush2.msra.mxu0 0.0
    %228 = vmatprep.subr.mxu0 0.0
    %229 = vmatpush2.msra.mxu0 0.0
    %230 = vmatprep.subr.mxu0 0.0
    %231 = vmatpush2.msra.mxu0 0.0
    %232 = vmatprep.subr.mxu0 0.0
    %233 = vmatpush2.msra.mxu0 0.0
    %234 = vmatprep.subr.mxu0 0.0
    %235 = vmatpush2.msra.mxu0 0.0
    %236 = vmatprep.subr.mxu0 0.0
    %237 = vmatpush2.msra.mxu0 0.0
    %238 = vmatprep.subr.mxu0 0.0
    %239 = vmatpush2.msra.mxu0 0.0
    %240 = vmatprep.subr.mxu0 0.0
    %241 = vmatpush2.msra.mxu0 0.0
    %242 = vmatprep.subr.mxu0 0.0
    %243 = vmatpush2.msra.mxu0 0.0
    %244 = vmatprep.subr.mxu0 0.0
    %245 = vmatpush2.msra.mxu0 0.0
    %246 = vmatprep.subr.mxu0 0.0
    %247 = vmatpush2.msra.mxu0 0.0
    %248 = vmatprep.subr.mxu0 0.0
    %249 = vmatpush2.msra.mxu0 0.0
    %250 = vmatprep.mubr.f32.mxu0 0.0
    %251 = vmatmul.mubr.f32.gmra.mxu0 %v184
    %v252 = vpop.f32.mrf.mxu0
    %v253 = vadd.f32 0.0, %v252
    %v254 = vpop.f32.mrf.mxu0
    %255 = vdwg.mxu0
    %v257 = vrot.slane %v253, 1
    %v258 = vrot.slane %v253, 2
    %v259 = vrot.slane %v253, 3
    %v260 = vrot.slane %v253, 4
    %v261 = vrot.slane %v253, 5
    %v262 = vrot.slane %v253, 6
    %v263 = vrot.slane %v253, 7
    %v272 = vadd.f32 %v139, %v253
    %v273 = vadd.f32 %v144, %v257
    %v274 = vadd.f32 %v149, %v258
    %v275 = vadd.f32 %v154, %v259
    %v276 = vadd.f32 %v159, %v260
    %v277 = vadd.f32 %v164, %v261
    %v278 = vadd.f32 %v169, %v262
    %v279 = vadd.f32 %v174, %v263
    %v280 = vxor.u32 %v272, 2147483648
    %v281 = vxor.u32 %v273, 2147483648
    %v282 = vxor.u32 %v274, 2147483648
    %v283 = vxor.u32 %v275, 2147483648
    %v284 = vxor.u32 %v276, 2147483648
    %v285 = vxor.u32 %v277, 2147483648
    %v286 = vxor.u32 %v278, 2147483648
    %v287 = vxor.u32 %v279, 2147483648
    %v288 = vmul.f32 %v280, 1.442695
    %v289 = vpow.pop %v288
    %v290 = vmul.f32 %v281, 1.442695
    %v291 = vpow.pop %v290
    %v292 = vmul.f32 %v282, 1.442695
    %v293 = vpow.pop %v292
    %v294 = vmul.f32 %v283, 1.442695
    %v295 = vpow.pop %v294
    %v296 = vmul.f32 %v284, 1.442695
    %v297 = vpow.pop %v296
    %v298 = vmul.f32 %v285, 1.442695
    %v299 = vpow.pop %v298
    %v300 = vmul.f32 %v286, 1.442695
    %v301 = vpow.pop %v300
    %v302 = vmul.f32 %v287, 1.442695
    %v303 = vpow.pop %v302
    %v304 = vadd.f32 %v289, 1.0
    %v305 = vadd.f32 %v291, 1.0
    %v306 = vadd.f32 %v293, 1.0
    %v307 = vadd.f32 %v295, 1.0
    %v308 = vadd.f32 %v297, 1.0
    %v309 = vadd.f32 %v299, 1.0
    %v310 = vadd.f32 %v301, 1.0
    %v311 = vadd.f32 %v303, 1.0
    %v312 = vrcp.pop %v304
    %v313 = vmul.f32 1.0, %v312
    %v314 = vrcp.pop %v305
    %v315 = vmul.f32 1.0, %v314
    %v316 = vrcp.pop %v306
    %v317 = vmul.f32 1.0, %v316
    %v318 = vrcp.pop %v307
    %v319 = vmul.f32 1.0, %v318
    %v320 = vrcp.pop %v308
    %v321 = vmul.f32 1.0, %v320
    %v322 = vrcp.pop %v309
    %v323 = vmul.f32 1.0, %v322
    %v324 = vrcp.pop %v310
    %v325 = vmul.f32 1.0, %v324
    %v326 = vrcp.pop %v311
    %v327 = vmul.f32 1.0, %v326
    %v329 = vlaneseq
    %v330 = vshrl.u32 %v329, 7
    %v331 = vsub.s32 0, %v330
    %v332 = vrot.slane %v181, %v331
    %333 = vrot.lane.b32.xlu0 %v332, 64
    %v334 = vpop.permute.xlu0 %333
    %v336 = vadd.f32 %v253, %v334
    %v338 = vrot.slane %v336, 1
    %v339 = vrot.slane %v336, 2
    %v340 = vrot.slane %v336, 3
    %v341 = vrot.slane %v336, 4
    %v342 = vrot.slane %v336, 5
    %v343 = vrot.slane %v336, 6
    %v344 = vrot.slane %v336, 7
    %345 = vrot.lane.b32.xlu0 %v336, 64
    %v346 = vpop.permute.xlu0 %345
    %347 = vrot.lane.b32.xlu0 %v338, 64
    %v348 = vpop.permute.xlu0 %347
    %349 = vrot.lane.b32.xlu0 %v339, 64
    %v350 = vpop.permute.xlu0 %349
    %351 = vrot.lane.b32.xlu0 %v340, 64
    %v352 = vpop.permute.xlu0 %351
    %353 = vrot.lane.b32.xlu0 %v341, 64
    %v354 = vpop.permute.xlu0 %353
    %355 = vrot.lane.b32.xlu0 %v342, 64
    %v356 = vpop.permute.xlu0 %355
    %357 = vrot.lane.b32.xlu0 %v343, 64
    %v358 = vpop.permute.xlu0 %357
    %359 = vrot.lane.b32.xlu0 %v344, 64
    %v360 = vpop.permute.xlu0 %359
    %v369 = vmul.f32 %v313, %v346
    %v370 = vmul.f32 %v315, %v348
    %v371 = vmul.f32 %v317, %v350
    %v372 = vmul.f32 %v319, %v352
    %v373 = vmul.f32 %v321, %v354
    %v374 = vmul.f32 %v323, %v356
    %v375 = vmul.f32 %v325, %v358
    %v376 = vmul.f32 %v327, %v360
    %385 = vrot.lane.b32.xlu0 %v369, 64
    %v386 = vpop.permute.xlu0 %385
    %387 = vrot.lane.b32.xlu0 %v370, 64
    %v388 = vpop.permute.xlu0 %387
    %389 = vrot.lane.b32.xlu0 %v371, 64
    %v390 = vpop.permute.xlu0 %389
    %391 = vrot.lane.b32.xlu0 %v372, 64
    %v392 = vpop.permute.xlu0 %391
    %393 = vrot.lane.b32.xlu0 %v373, 64
    %v394 = vpop.permute.xlu0 %393
    %395 = vrot.lane.b32.xlu0 %v374, 64
    %v396 = vpop.permute.xlu0 %395
    %397 = vrot.lane.b32.xlu0 %v375, 64
    %v398 = vpop.permute.xlu0 %397
    %399 = vrot.lane.b32.xlu0 %v376, 64
    %v400 = vpop.permute.xlu0 %399
    %v409 = vadd.f32 %v139, %v386
    %v410 = vadd.f32 %v144, %v388
    %v411 = vadd.f32 %v149, %v390
    %v412 = vadd.f32 %v154, %v392
    %v413 = vadd.f32 %v159, %v394
    %v414 = vadd.f32 %v164, %v396
    %v415 = vadd.f32 %v169, %v398
    %v416 = vadd.f32 %v174, %v400
    %v417 = vtanh.pop %v409
    %v418 = vtanh.pop %v410
    %v419 = vtanh.pop %v411
    %v420 = vtanh.pop %v412
    %v421 = vtanh.pop %v413
    %v422 = vtanh.pop %v414
    %v423 = vtanh.pop %v415
    %v424 = vtanh.pop %v416
    %v425 = vsub.f32 1.0, %v313
    %v426 = vsub.f32 1.0, %v315
    %v427 = vsub.f32 1.0, %v317
    %v428 = vsub.f32 1.0, %v319
    %v429 = vsub.f32 1.0, %v321
    %v430 = vsub.f32 1.0, %v323
    %v431 = vsub.f32 1.0, %v325
    %v432 = vsub.f32 1.0, %v327
    %441 = vrot.lane.b32.xlu0 %v417, 96
    %v442 = vpop.permute.xlu0 %441
    %443 = vrot.lane.b32.xlu0 %v418, 96
    %v444 = vpop.permute.xlu0 %443
    %445 = vrot.lane.b32.xlu0 %v419, 96
    %v446 = vpop.permute.xlu0 %445
    %447 = vrot.lane.b32.xlu0 %v420, 96
    %v448 = vpop.permute.xlu0 %447
    %449 = vrot.lane.b32.xlu0 %v421, 96
    %v450 = vpop.permute.xlu0 %449
    %451 = vrot.lane.b32.xlu0 %v422, 96
    %v452 = vpop.permute.xlu0 %451
    %453 = vrot.lane.b32.xlu0 %v423, 96
    %v454 = vpop.permute.xlu0 %453
    %455 = vrot.lane.b32.xlu0 %v424, 96
    %v456 = vpop.permute.xlu0 %455
    %v465 = vmul.f32 %v425, %v442
    %v466 = vmul.f32 %v426, %v444
    %v467 = vmul.f32 %v427, %v446
    %v468 = vmul.f32 %v428, %v448
    %v469 = vmul.f32 %v429, %v450
    %v470 = vmul.f32 %v430, %v452
    %v471 = vmul.f32 %v431, %v454
    %v472 = vmul.f32 %v432, %v456
    %v473 = vmul.f32 %v313, 0.0
    %v474 = vmul.f32 %v315, 0.0
    %v475 = vmul.f32 %v317, 0.0
    %v476 = vmul.f32 %v319, 0.0
    %v477 = vmul.f32 %v321, 0.0
    %v478 = vmul.f32 %v323, 0.0
    %v479 = vmul.f32 %v325, 0.0
    %v480 = vmul.f32 %v327, 0.0
    %v481 = vadd.f32 %v465, %v473
    %v482 = vadd.f32 %v466, %v474
    %v483 = vadd.f32 %v467, %v475
    %v484 = vadd.f32 %v468, %v476
    %v485 = vadd.f32 %v469, %v477
    %v486 = vadd.f32 %v470, %v478
    %v487 = vadd.f32 %v471, %v479
    %v488 = vadd.f32 %v472, %v480
    %v497 = vrot.slane %v482, 7
    %vm498 = vcmask 1041409
    %v499 = vsel %vm498, %v497, %v481
    %v500 = vrot.slane %v483, 6
    %vm501 = vcmask 1042434
    %v502 = vsel %vm501, %v500, %v499
    %v503 = vrot.slane %v484, 5
    %vm504 = vcmask 1043459
    %v505 = vsel %vm504, %v503, %v502
    %v506 = vrot.slane %v485, 4
    %vm507 = vcmask 1044484
    %v508 = vsel %vm507, %v506, %v505
    %v509 = vrot.slane %v486, 3
    %vm510 = vcmask 1045509
    %v511 = vsel %vm510, %v509, %v508
    %v512 = vrot.slane %v487, 2
    %vm513 = vcmask 1046534
    %v514 = vsel %vm513, %v512, %v511
    %v515 = vrot.slane %v488, 1
    %vm516 = vcmask 1047559
    %v517 = vsel %vm516, %v515, %v514
    %518 = vrot.lane.b32.xlu0 %v517, 96
    %v519 = vpop.permute.xlu0 %518
    %v520 = vsel %vm182, %v519, 0
    %522 = vmatprep.subr.mxu0 0.0
    %523 = vmatpush1.msra.mxu0 0.0
    %524 = vmatprep.subr.mxu0 0.0
    %525 = vmatpush1.msra.mxu0 0.0
    %526 = vmatprep.subr.mxu0 0.0
    %527 = vmatpush1.msra.mxu0 0.0
    %528 = vmatprep.subr.mxu0 0.0
    %529 = vmatpush1.msra.mxu0 0.0
    %530 = vmatprep.subr.mxu0 0.0
    %531 = vmatpush1.msra.mxu0 0.0
    %532 = vmatprep.subr.mxu0 0.0
    %533 = vmatpush1.msra.mxu0 0.0
    %534 = vmatprep.subr.mxu0 0.0
    %535 = vmatpush1.msra.mxu0 0.0
    %536 = vmatprep.subr.mxu0 0.0
    %537 = vmatpush1.msra.mxu0 0.0
    %538 = vmatprep.subr.mxu0 0.0
    %539 = vmatpush1.msra.mxu0 0.0
    %540 = vmatprep.subr.mxu0 0.0
    %541 = vmatpush1.msra.mxu0 0.0
    %542 = vmatprep.subr.mxu0 0.0
    %543 = vmatpush1.msra.mxu0 0.0
    %544 = vmatprep.subr.mxu0 0.0
    %545 = vmatpush1.msra.mxu0 0.0
    %546 = vmatprep.subr.mxu0 0.0
    %547 = vmatpush1.msra.mxu0 %v180
    %548 = vmatprep.subr.mxu0 0.0
    %549 = vmatpush1.msra.mxu0 %v179
    %550 = vmatprep.subr.mxu0 0.0
    %551 = vmatpush1.msra.mxu0 %v178
    %552 = vmatprep.subr.mxu0 0.0
    %553 = vmatpush1.msra.mxu0 %v177
    %554 = vmatprep.subr.mxu0 0.0
    %555 = vmatpush2.msra.mxu0 0.0
    %556 = vmatprep.subr.mxu0 0.0
    %557 = vmatpush2.msra.mxu0 0.0
    %558 = vmatprep.subr.mxu0 0.0
    %559 = vmatpush2.msra.mxu0 0.0
    %560 = vmatprep.subr.mxu0 0.0
    %561 = vmatpush2.msra.mxu0 0.0
    %562 = vmatprep.subr.mxu0 0.0
    %563 = vmatpush2.msra.mxu0 0.0
    %564 = vmatprep.subr.mxu0 0.0
    %565 = vmatpush2.msra.mxu0 0.0
    %566 = vmatprep.subr.mxu0 0.0
    %567 = vmatpush2.msra.mxu0 0.0
    %568 = vmatprep.subr.mxu0 0.0
    %569 = vmatpush2.msra.mxu0 0.0
    %570 = vmatprep.subr.mxu0 0.0
    %571 = vmatpush2.msra.mxu0 0.0
    %572 = vmatprep.subr.mxu0 0.0
    %573 = vmatpush2.msra.mxu0 0.0
    %574 = vmatprep.subr.mxu0 0.0
    %575 = vmatpush2.msra.mxu0 0.0
    %576 = vmatprep.subr.mxu0 0.0
    %577 = vmatpush2.msra.mxu0 0.0
    %578 = vmatprep.subr.mxu0 0.0
    %579 = vmatpush2.msra.mxu0 0.0
    %580 = vmatprep.subr.mxu0 0.0
    %581 = vmatpush2.msra.mxu0 0.0
    %582 = vmatprep.subr.mxu0 0.0
    %583 = vmatpush2.msra.mxu0 0.0
    %584 = vmatprep.subr.mxu0 0.0
    %585 = vmatpush2.msra.mxu0 0.0
    %586 = vmatprep.mubr.f32.mxu0 0.0
    %587 = vmatmul.mubr.f32.gmra.mxu0 %v520
    %v588 = vpop.f32.mrf.mxu0
    %v589 = vadd.f32 0.0, %v588
    %v590 = vpop.f32.mrf.mxu0
    %591 = vdwg.mxu0
    %v593 = vrot.slane %v589, 7
    %v594 = vrot.slane %v589, 1
    %v595 = vrot.slane %v589, 2
    %v596 = vrot.slane %v589, 3
    %v597 = vrot.slane %v589, 4
    %v598 = vrot.slane %v589, 5
    %v599 = vrot.slane %v589, 6
    %v608 = vadd.f32 %v139, %v593
    %v609 = vadd.f32 %v144, %v589
    %v610 = vadd.f32 %v149, %v594
    %v611 = vadd.f32 %v154, %v595
    %v612 = vadd.f32 %v159, %v596
    %v613 = vadd.f32 %v164, %v597
    %v614 = vadd.f32 %v169, %v598
    %v615 = vadd.f32 %v174, %v599
    %v616 = vxor.u32 %v608, 2147483648
    %v617 = vxor.u32 %v609, 2147483648
    %v618 = vxor.u32 %v610, 2147483648
    %v619 = vxor.u32 %v611, 2147483648
    %v620 = vxor.u32 %v612, 2147483648
    %v621 = vxor.u32 %v613, 2147483648
    %v622 = vxor.u32 %v614, 2147483648
    %v623 = vxor.u32 %v615, 2147483648
    %v624 = vmul.f32 %v616, 1.442695
    %v625 = vpow.pop %v624
    %v626 = vmul.f32 %v617, 1.442695
    %v627 = vpow.pop %v626
    %v628 = vmul.f32 %v618, 1.442695
    %v629 = vpow.pop %v628
    %v630 = vmul.f32 %v619, 1.442695
    %v631 = vpow.pop %v630
    %v632 = vmul.f32 %v620, 1.442695
    %v633 = vpow.pop %v632
    %v634 = vmul.f32 %v621, 1.442695
    %v635 = vpow.pop %v634
    %v636 = vmul.f32 %v622, 1.442695
    %v637 = vpow.pop %v636
    %v638 = vmul.f32 %v623, 1.442695
    %v639 = vpow.pop %v638
    %v640 = vadd.f32 %v625, 1.0
    %v641 = vadd.f32 %v627, 1.0
    %v642 = vadd.f32 %v629, 1.0
    %v643 = vadd.f32 %v631, 1.0
    %v644 = vadd.f32 %v633, 1.0
    %v645 = vadd.f32 %v635, 1.0
    %v646 = vadd.f32 %v637, 1.0
    %v647 = vadd.f32 %v639, 1.0
    %v648 = vrcp.pop %v640
    %v649 = vmul.f32 1.0, %v648
    %v650 = vrcp.pop %v641
    %v651 = vmul.f32 1.0, %v650
    %v652 = vrcp.pop %v642
    %v653 = vmul.f32 1.0, %v652
    %v654 = vrcp.pop %v643
    %v655 = vmul.f32 1.0, %v654
    %v656 = vrcp.pop %v644
    %v657 = vmul.f32 1.0, %v656
    %v658 = vrcp.pop %v645
    %v659 = vmul.f32 1.0, %v658
    %v660 = vrcp.pop %v646
    %v661 = vmul.f32 1.0, %v660
    %v662 = vrcp.pop %v647
    %v663 = vmul.f32 1.0, %v662
    %v664 = vadd.f32 %v589, %v334
    %v666 = vrot.slane %v664, 7
    %v667 = vrot.slane %v664, 1
    %v668 = vrot.slane %v664, 2
    %v669 = vrot.slane %v664, 3
    %v670 = vrot.slane %v664, 4
    %v671 = vrot.slane %v664, 5
    %v672 = vrot.slane %v664, 6
    %673 = vrot.lane.b32.xlu0 %v666, 64
    %v674 = vpop.permute.xlu0 %673
    %675 = vrot.lane.b32.xlu0 %v664, 64
    %v676 = vpop.permute.xlu0 %675
    %677 = vrot.lane.b32.xlu0 %v667, 64
    %v678 = vpop.permute.xlu0 %677
    %679 = vrot.lane.b32.xlu0 %v668, 64
    %v680 = vpop.permute.xlu0 %679
    %681 = vrot.lane.b32.xlu0 %v669, 64
    %v682 = vpop.permute.xlu0 %681
    %683 = vrot.lane.b32.xlu0 %v670, 64
    %v684 = vpop.permute.xlu0 %683
    %685 = vrot.lane.b32.xlu0 %v671, 64
    %v686 = vpop.permute.xlu0 %685
    %687 = vrot.lane.b32.xlu0 %v672, 64
    %v688 = vpop.permute.xlu0 %687
    %v697 = vmul.f32 %v649, %v674
    %v698 = vmul.f32 %v651, %v676
    %v699 = vmul.f32 %v653, %v678
    %v700 = vmul.f32 %v655, %v680
    %v701 = vmul.f32 %v657, %v682
    %v702 = vmul.f32 %v659, %v684
    %v703 = vmul.f32 %v661, %v686
    %v704 = vmul.f32 %v663, %v688
    %713 = vrot.lane.b32.xlu0 %v697, 64
    %v714 = vpop.permute.xlu0 %713
    %715 = vrot.lane.b32.xlu0 %v698, 64
    %v716 = vpop.permute.xlu0 %715
    %717 = vrot.lane.b32.xlu0 %v699, 64
    %v718 = vpop.permute.xlu0 %717
    %719 = vrot.lane.b32.xlu0 %v700, 64
    %v720 = vpop.permute.xlu0 %719
    %721 = vrot.lane.b32.xlu0 %v701, 64
    %v722 = vpop.permute.xlu0 %721
    %723 = vrot.lane.b32.xlu0 %v702, 64
    %v724 = vpop.permute.xlu0 %723
    %725 = vrot.lane.b32.xlu0 %v703, 64
    %v726 = vpop.permute.xlu0 %725
    %727 = vrot.lane.b32.xlu0 %v704, 64
    %v728 = vpop.permute.xlu0 %727
    %v737 = vadd.f32 %v139, %v714
    %v738 = vadd.f32 %v144, %v716
    %v739 = vadd.f32 %v149, %v718
    %v740 = vadd.f32 %v154, %v720
    %v741 = vadd.f32 %v159, %v722
    %v742 = vadd.f32 %v164, %v724
    %v743 = vadd.f32 %v169, %v726
    %v744 = vadd.f32 %v174, %v728
    %v745 = vtanh.pop %v737
    %v746 = vtanh.pop %v738
    %v747 = vtanh.pop %v739
    %v748 = vtanh.pop %v740
    %v749 = vtanh.pop %v741
    %v750 = vtanh.pop %v742
    %v751 = vtanh.pop %v743
    %v752 = vtanh.pop %v744
    %v753 = vsub.f32 1.0, %v649
    %v754 = vsub.f32 1.0, %v651
    %v755 = vsub.f32 1.0, %v653
    %v756 = vsub.f32 1.0, %v655
    %v757 = vsub.f32 1.0, %v657
    %v758 = vsub.f32 1.0, %v659
    %v759 = vsub.f32 1.0, %v661
    %v760 = vsub.f32 1.0, %v663
    %769 = vrot.lane.b32.xlu0 %v745, 96
    %v770 = vpop.permute.xlu0 %769
    %771 = vrot.lane.b32.xlu0 %v746, 96
    %v772 = vpop.permute.xlu0 %771
    %773 = vrot.lane.b32.xlu0 %v747, 96
    %v774 = vpop.permute.xlu0 %773
    %775 = vrot.lane.b32.xlu0 %v748, 96
    %v776 = vpop.permute.xlu0 %775
    %777 = vrot.lane.b32.xlu0 %v749, 96
    %v778 = vpop.permute.xlu0 %777
    %779 = vrot.lane.b32.xlu0 %v750, 96
    %v780 = vpop.permute.xlu0 %779
    %781 = vrot.lane.b32.xlu0 %v751, 96
    %v782 = vpop.permute.xlu0 %781
    %783 = vrot.lane.b32.xlu0 %v752, 96
    %v784 = vpop.permute.xlu0 %783
    %v793 = vmul.f32 %v753, %v770
    %v794 = vmul.f32 %v754, %v772
    %v795 = vmul.f32 %v755, %v774
    %v796 = vmul.f32 %v756, %v776
    %v797 = vmul.f32 %v757, %v778
    %v798 = vmul.f32 %v758, %v780
    %v799 = vmul.f32 %v759, %v782
    %v800 = vmul.f32 %v760, %v784
    %v801 = vrot.slane %v481, 7
    %v802 = vrot.slane %v483, 7
    %v803 = vrot.slane %v484, 7
    %v804 = vrot.slane %v485, 7
    %v805 = vrot.slane %v486, 7
    %v806 = vrot.slane %v487, 7
    %v807 = vrot.slane %v488, 7
    %v816 = vmul.f32 %v649, %v801
    %v817 = vmul.f32 %v651, %v497
    %v818 = vmul.f32 %v653, %v802
    %v819 = vmul.f32 %v655, %v803
    %v820 = vmul.f32 %v657, %v804
    %v821 = vmul.f32 %v659, %v805
    %v822 = vmul.f32 %v661, %v806
    %v823 = vmul.f32 %v663, %v807
    %v824 = vadd.f32 %v793, %v816
    %v825 = vadd.f32 %v794, %v817
    %v826 = vadd.f32 %v795, %v818
    %v827 = vadd.f32 %v796, %v819
    %v828 = vadd.f32 %v797, %v820
    %v829 = vadd.f32 %v798, %v821
    %v830 = vadd.f32 %v799, %v822
    %v831 = vadd.f32 %v800, %v823
    %v840 = vrot.slane %v824, 1
    %v841 = vsel %vm498, %v825, %v840
    %v842 = vrot.slane %v826, 7
    %v843 = vsel %vm501, %v842, %v841
    %v844 = vrot.slane %v827, 6
    %v845 = vsel %vm504, %v844, %v843
    %v846 = vrot.slane %v828, 5
    %v847 = vsel %vm507, %v846, %v845
    %v848 = vrot.slane %v829, 4
    %v849 = vsel %vm510, %v848, %v847
    %v850 = vrot.slane %v830, 3
    %v851 = vsel %vm513, %v850, %v849
    %v852 = vrot.slane %v831, 2
    %v853 = vsel %vm516, %v852, %v851
    %854 = vrot.lane.b32.xlu0 %v853, 96
    %v855 = vpop.permute.xlu0 %854
    %v856 = vsel %vm182, %v855, 0
    %858 = vmatprep.subr.mxu0 0.0
    %859 = vmatpush1.msra.mxu0 0.0
    %860 = vmatprep.subr.mxu0 0.0
    %861 = vmatpush1.msra.mxu0 0.0
    %862 = vmatprep.subr.mxu0 0.0
    %863 = vmatpush1.msra.mxu0 0.0
    %864 = vmatprep.subr.mxu0 0.0
    %865 = vmatpush1.msra.mxu0 0.0
    %866 = vmatprep.subr.mxu0 0.0
    %867 = vmatpush1.msra.mxu0 0.0
    %868 = vmatprep.subr.mxu0 0.0
    %869 = vmatpush1.msra.mxu0 0.0
    %870 = vmatprep.subr.mxu0 0.0
    %871 = vmatpush1.msra.mxu0 0.0
    %872 = vmatprep.subr.mxu0 0.0
    %873 = vmatpush1.msra.mxu0 0.0
    %874 = vmatprep.subr.mxu0 0.0
    %875 = vmatpush1.msra.mxu0 0.0
    %876 = vmatprep.subr.mxu0 0.0
    %877 = vmatpush1.msra.mxu0 0.0
    %878 = vmatprep.subr.mxu0 0.0
    %879 = vmatpush1.msra.mxu0 0.0
    %880 = vmatprep.subr.mxu0 0.0
    %881 = vmatpush1.msra.mxu0 0.0
    %882 = vmatprep.subr.mxu0 0.0
    %883 = vmatpush1.msra.mxu0 %v180
    %884 = vmatprep.subr.mxu0 0.0
    %885 = vmatpush1.msra.mxu0 %v179
    %886 = vmatprep.subr.mxu0 0.0
    %887 = vmatpush1.msra.mxu0 %v178
    %888 = vmatprep.subr.mxu0 0.0
    %889 = vmatpush1.msra.mxu0 %v177
    %890 = vmatprep.subr.mxu0 0.0
    %891 = vmatpush2.msra.mxu0 0.0
    %892 = vmatprep.subr.mxu0 0.0
    %893 = vmatpush2.msra.mxu0 0.0
    %894 = vmatprep.subr.mxu0 0.0
    %895 = vmatpush2.msra.mxu0 0.0
    %896 = vmatprep.subr.mxu0 0.0
    %897 = vmatpush2.msra.mxu0 0.0
    %898 = vmatprep.subr.mxu0 0.0
    %899 = vmatpush2.msra.mxu0 0.0
    %900 = vmatprep.subr.mxu0 0.0
    %901 = vmatpush2.msra.mxu0 0.0
    %902 = vmatprep.subr.mxu0 0.0
    %903 = vmatpush2.msra.mxu0 0.0
    %904 = vmatprep.subr.mxu0 0.0
    %905 = vmatpush2.msra.mxu0 0.0
    %906 = vmatprep.subr.mxu0 0.0
    %907 = vmatpush2.msra.mxu0 0.0
    %908 = vmatprep.subr.mxu0 0.0
    %909 = vmatpush2.msra.mxu0 0.0
    %910 = vmatprep.subr.mxu0 0.0
    %911 = vmatpush2.msra.mxu0 0.0
    %912 = vmatprep.subr.mxu0 0.0
    %913 = vmatpush2.msra.mxu0 0.0
    %914 = vmatprep.subr.mxu0 0.0
    %915 = vmatpush2.msra.mxu0 0.0
    %916 = vmatprep.subr.mxu0 0.0
    %917 = vmatpush2.msra.mxu0 0.0
    %918 = vmatprep.subr.mxu0 0.0
    %919 = vmatpush2.msra.mxu0 0.0
    %920 = vmatprep.subr.mxu0 0.0
    %921 = vmatpush2.msra.mxu0 0.0
    %922 = vmatprep.mubr.f32.mxu0 0.0
    %923 = vmatmul.mubr.f32.gmra.mxu0 %v856
    %v924 = vpop.f32.mrf.mxu0
    %v925 = vadd.f32 0.0, %v924
    %v926 = vpop.f32.mrf.mxu0
    %927 = vdwg.mxu0
    %v929 = vrot.slane %v925, 6
    %v930 = vrot.slane %v925, 7
    %v931 = vrot.slane %v925, 1
    %v932 = vrot.slane %v925, 2
    %v933 = vrot.slane %v925, 3
    %v934 = vrot.slane %v925, 4
    %v935 = vrot.slane %v925, 5
    %v944 = vadd.f32 %v139, %v929
    %v945 = vadd.f32 %v144, %v930
    %v946 = vadd.f32 %v149, %v925
    %v947 = vadd.f32 %v154, %v931
    %v948 = vadd.f32 %v159, %v932
    %v949 = vadd.f32 %v164, %v933
    %v950 = vadd.f32 %v169, %v934
    %v951 = vadd.f32 %v174, %v935
    %v952 = vxor.u32 %v944, 2147483648
    %v953 = vxor.u32 %v945, 2147483648
    %v954 = vxor.u32 %v946, 2147483648
    %v955 = vxor.u32 %v947, 2147483648
    %v956 = vxor.u32 %v948, 2147483648
    %v957 = vxor.u32 %v949, 2147483648
    %v958 = vxor.u32 %v950, 2147483648
    %v959 = vxor.u32 %v951, 2147483648
    %v960 = vmul.f32 %v952, 1.442695
    %v961 = vpow.pop %v960
    %v962 = vmul.f32 %v953, 1.442695
    %v963 = vpow.pop %v962
    %v964 = vmul.f32 %v954, 1.442695
    %v965 = vpow.pop %v964
    %v966 = vmul.f32 %v955, 1.442695
    %v967 = vpow.pop %v966
    %v968 = vmul.f32 %v956, 1.442695
    %v969 = vpow.pop %v968
    %v970 = vmul.f32 %v957, 1.442695
    %v971 = vpow.pop %v970
    %v972 = vmul.f32 %v958, 1.442695
    %v973 = vpow.pop %v972
    %v974 = vmul.f32 %v959, 1.442695
    %v975 = vpow.pop %v974
    %v976 = vadd.f32 %v961, 1.0
    %v977 = vadd.f32 %v963, 1.0
    %v978 = vadd.f32 %v965, 1.0
    %v979 = vadd.f32 %v967, 1.0
    %v980 = vadd.f32 %v969, 1.0
    %v981 = vadd.f32 %v971, 1.0
    %v982 = vadd.f32 %v973, 1.0
    %v983 = vadd.f32 %v975, 1.0
    %v984 = vrcp.pop %v976
    %v985 = vmul.f32 1.0, %v984
    %v986 = vrcp.pop %v977
    %v987 = vmul.f32 1.0, %v986
    %v988 = vrcp.pop %v978
    %v989 = vmul.f32 1.0, %v988
    %v990 = vrcp.pop %v979
    %v991 = vmul.f32 1.0, %v990
    %v992 = vrcp.pop %v980
    %v993 = vmul.f32 1.0, %v992
    %v994 = vrcp.pop %v981
    %v995 = vmul.f32 1.0, %v994
    %v996 = vrcp.pop %v982
    %v997 = vmul.f32 1.0, %v996
    %v998 = vrcp.pop %v983
    %v999 = vmul.f32 1.0, %v998
    %v1000 = vadd.f32 %v925, %v334
    %v1002 = vrot.slane %v1000, 6
    %v1003 = vrot.slane %v1000, 7
    %v1004 = vrot.slane %v1000, 1
    %v1005 = vrot.slane %v1000, 2
    %v1006 = vrot.slane %v1000, 3
    %v1007 = vrot.slane %v1000, 4
    %v1008 = vrot.slane %v1000, 5
    %1009 = vrot.lane.b32.xlu0 %v1002, 64
    %v1010 = vpop.permute.xlu0 %1009
    %1011 = vrot.lane.b32.xlu0 %v1003, 64
    %v1012 = vpop.permute.xlu0 %1011
    %1013 = vrot.lane.b32.xlu0 %v1000, 64
    %v1014 = vpop.permute.xlu0 %1013
    %1015 = vrot.lane.b32.xlu0 %v1004, 64
    %v1016 = vpop.permute.xlu0 %1015
    %1017 = vrot.lane.b32.xlu0 %v1005, 64
    %v1018 = vpop.permute.xlu0 %1017
    %1019 = vrot.lane.b32.xlu0 %v1006, 64
    %v1020 = vpop.permute.xlu0 %1019
    %1021 = vrot.lane.b32.xlu0 %v1007, 64
    %v1022 = vpop.permute.xlu0 %1021
    %1023 = vrot.lane.b32.xlu0 %v1008, 64
    %v1024 = vpop.permute.xlu0 %1023
    %v1033 = vmul.f32 %v985, %v1010
    %v1034 = vmul.f32 %v987, %v1012
    %v1035 = vmul.f32 %v989, %v1014
    %v1036 = vmul.f32 %v991, %v1016
    %v1037 = vmul.f32 %v993, %v1018
    %v1038 = vmul.f32 %v995, %v1020
    %v1039 = vmul.f32 %v997, %v1022
    %v1040 = vmul.f32 %v999, %v1024
    %1049 = vrot.lane.b32.xlu0 %v1033, 64
    %v1050 = vpop.permute.xlu0 %1049
    %1051 = vrot.lane.b32.xlu0 %v1034, 64
    %v1052 = vpop.permute.xlu0 %1051
    %1053 = vrot.lane.b32.xlu0 %v1035, 64
    %v1054 = vpop.permute.xlu0 %1053
    %1055 = vrot.lane.b32.xlu0 %v1036, 64
    %v1056 = vpop.permute.xlu0 %1055
    %1057 = vrot.lane.b32.xlu0 %v1037, 64
    %v1058 = vpop.permute.xlu0 %1057
    %1059 = vrot.lane.b32.xlu0 %v1038, 64
    %v1060 = vpop.permute.xlu0 %1059
    %1061 = vrot.lane.b32.xlu0 %v1039, 64
    %v1062 = vpop.permute.xlu0 %1061
    %1063 = vrot.lane.b32.xlu0 %v1040, 64
    %v1064 = vpop.permute.xlu0 %1063
    %v1073 = vadd.f32 %v139, %v1050
    %v1074 = vadd.f32 %v144, %v1052
    %v1075 = vadd.f32 %v149, %v1054
    %v1076 = vadd.f32 %v154, %v1056
    %v1077 = vadd.f32 %v159, %v1058
    %v1078 = vadd.f32 %v164, %v1060
    %v1079 = vadd.f32 %v169, %v1062
    %v1080 = vadd.f32 %v174, %v1064
    %v1081 = vtanh.pop %v1073
    %v1082 = vtanh.pop %v1074
    %v1083 = vtanh.pop %v1075
    %v1084 = vtanh.pop %v1076
    %v1085 = vtanh.pop %v1077
    %v1086 = vtanh.pop %v1078
    %v1087 = vtanh.pop %v1079
    %v1088 = vtanh.pop %v1080
    %v1089 = vsub.f32 1.0, %v985
    %v1090 = vsub.f32 1.0, %v987
    %v1091 = vsub.f32 1.0, %v989
    %v1092 = vsub.f32 1.0, %v991
    %v1093 = vsub.f32 1.0, %v993
    %v1094 = vsub.f32 1.0, %v995
    %v1095 = vsub.f32 1.0, %v997
    %v1096 = vsub.f32 1.0, %v999
    %1105 = vrot.lane.b32.xlu0 %v1081, 96
    %v1106 = vpop.permute.xlu0 %1105
    %1107 = vrot.lane.b32.xlu0 %v1082, 96
    %v1108 = vpop.permute.xlu0 %1107
    %1109 = vrot.lane.b32.xlu0 %v1083, 96
    %v1110 = vpop.permute.xlu0 %1109
    %1111 = vrot.lane.b32.xlu0 %v1084, 96
    %v1112 = vpop.permute.xlu0 %1111
    %1113 = vrot.lane.b32.xlu0 %v1085, 96
    %v1114 = vpop.permute.xlu0 %1113
    %1115 = vrot.lane.b32.xlu0 %v1086, 96
    %v1116 = vpop.permute.xlu0 %1115
    %1117 = vrot.lane.b32.xlu0 %v1087, 96
    %v1118 = vpop.permute.xlu0 %1117
    %1119 = vrot.lane.b32.xlu0 %v1088, 96
    %v1120 = vpop.permute.xlu0 %1119
    %v1129 = vmul.f32 %v1089, %v1106
    %v1130 = vmul.f32 %v1090, %v1108
    %v1131 = vmul.f32 %v1091, %v1110
    %v1132 = vmul.f32 %v1092, %v1112
    %v1133 = vmul.f32 %v1093, %v1114
    %v1134 = vmul.f32 %v1094, %v1116
    %v1135 = vmul.f32 %v1095, %v1118
    %v1136 = vmul.f32 %v1096, %v1120
    %v1137 = vrot.slane %v824, 7
    %v1138 = vrot.slane %v825, 7
    %v1139 = vrot.slane %v827, 7
    %v1140 = vrot.slane %v828, 7
    %v1141 = vrot.slane %v829, 7
    %v1142 = vrot.slane %v830, 7
    %v1143 = vrot.slane %v831, 7
    %v1152 = vmul.f32 %v985, %v1137
    %v1153 = vmul.f32 %v987, %v1138
    %v1154 = vmul.f32 %v989, %v842
    %v1155 = vmul.f32 %v991, %v1139
    %v1156 = vmul.f32 %v993, %v1140
    %v1157 = vmul.f32 %v995, %v1141
    %v1158 = vmul.f32 %v997, %v1142
    %v1159 = vmul.f32 %v999, %v1143
    %v1160 = vadd.f32 %v1129, %v1152
    %v1161 = vadd.f32 %v1130, %v1153
    %v1162 = vadd.f32 %v1131, %v1154
    %v1163 = vadd.f32 %v1132, %v1155
    %v1164 = vadd.f32 %v1133, %v1156
    %v1165 = vadd.f32 %v1134, %v1157
    %v1166 = vadd.f32 %v1135, %v1158
    %v1167 = vadd.f32 %v1136, %v1159
    %v1176 = vrot.slane %v1160, 2
    %v1177 = vrot.slane %v1161, 1
    %v1178 = vsel %vm498, %v1177, %v1176
    %v1179 = vsel %vm501, %v1162, %v1178
    %v1180 = vrot.slane %v1163, 7
    %v1181 = vsel %vm504, %v1180, %v1179
    %v1182 = vrot.slane %v1164, 6
    %v1183 = vsel %vm507, %v1182, %v1181
    %v1184 = vrot.slane %v1165, 5
    %v1185 = vsel %vm510, %v1184, %v1183
    %v1186 = vrot.slane %v1166, 4
    %v1187 = vsel %vm513, %v1186, %v1185
    %v1188 = vrot.slane %v1167, 3
    %v1189 = vsel %vm516, %v1188, %v1187
    %1190 = vrot.lane.b32.xlu0 %v1189, 96
    %v1191 = vpop.permute.xlu0 %1190
    %v1192 = vsel %vm182, %v1191, 0
    %1194 = vmatprep.subr.mxu0 0.0
    %1195 = vmatpush1.msra.mxu0 0.0
    %1196 = vmatprep.subr.mxu0 0.0
    %1197 = vmatpush1.msra.mxu0 0.0
    %1198 = vmatprep.subr.mxu0 0.0
    %1199 = vmatpush1.msra.mxu0 0.0
    %1200 = vmatprep.subr.mxu0 0.0
    %1201 = vmatpush1.msra.mxu0 0.0
    %1202 = vmatprep.subr.mxu0 0.0
    %1203 = vmatpush1.msra.mxu0 0.0
    %1204 = vmatprep.subr.mxu0 0.0
    %1205 = vmatpush1.msra.mxu0 0.0
    %1206 = vmatprep.subr.mxu0 0.0
    %1207 = vmatpush1.msra.mxu0 0.0
    %1208 = vmatprep.subr.mxu0 0.0
    %1209 = vmatpush1.msra.mxu0 0.0
    %1210 = vmatprep.subr.mxu0 0.0
    %1211 = vmatpush1.msra.mxu0 0.0
    %1212 = vmatprep.subr.mxu0 0.0
    %1213 = vmatpush1.msra.mxu0 0.0
    %1214 = vmatprep.subr.mxu0 0.0
    %1215 = vmatpush1.msra.mxu0 0.0
    %1216 = vmatprep.subr.mxu0 0.0
    %1217 = vmatpush1.msra.mxu0 0.0
    %1218 = vmatprep.subr.mxu0 0.0
    %1219 = vmatpush1.msra.mxu0 %v180
    %1220 = vmatprep.subr.mxu0 0.0
    %1221 = vmatpush1.msra.mxu0 %v179
    %1222 = vmatprep.subr.mxu0 0.0
    %1223 = vmatpush1.msra.mxu0 %v178
    %1224 = vmatprep.subr.mxu0 0.0
    %1225 = vmatpush1.msra.mxu0 %v177
    %1226 = vmatprep.subr.mxu0 0.0
    %1227 = vmatpush2.msra.mxu0 0.0
    %1228 = vmatprep.subr.mxu0 0.0
    %1229 = vmatpush2.msra.mxu0 0.0
    %1230 = vmatprep.subr.mxu0 0.0
    %1231 = vmatpush2.msra.mxu0 0.0
    %1232 = vmatprep.subr.mxu0 0.0
    %1233 = vmatpush2.msra.mxu0 0.0
    %1234 = vmatprep.subr.mxu0 0.0
    %1235 = vmatpush2.msra.mxu0 0.0
    %1236 = vmatprep.subr.mxu0 0.0
    %1237 = vmatpush2.msra.mxu0 0.0
    %1238 = vmatprep.subr.mxu0 0.0
    %1239 = vmatpush2.msra.mxu0 0.0
    %1240 = vmatprep.subr.mxu0 0.0
    %1241 = vmatpush2.msra.mxu0 0.0
    %1242 = vmatprep.subr.mxu0 0.0
    %1243 = vmatpush2.msra.mxu0 0.0
    %1244 = vmatprep.subr.mxu0 0.0
    %1245 = vmatpush2.msra.mxu0 0.0
    %1246 = vmatprep.subr.mxu0 0.0
    %1247 = vmatpush2.msra.mxu0 0.0
    %1248 = vmatprep.subr.mxu0 0.0
    %1249 = vmatpush2.msra.mxu0 0.0
    %1250 = vmatprep.subr.mxu0 0.0
    %1251 = vmatpush2.msra.mxu0 0.0
    %1252 = vmatprep.subr.mxu0 0.0
    %1253 = vmatpush2.msra.mxu0 0.0
    %1254 = vmatprep.subr.mxu0 0.0
    %1255 = vmatpush2.msra.mxu0 0.0
    %1256 = vmatprep.subr.mxu0 0.0
    %1257 = vmatpush2.msra.mxu0 0.0
    %1258 = vmatprep.mubr.f32.mxu0 0.0
    %1259 = vmatmul.mubr.f32.gmra.mxu0 %v1192
    %v1260 = vpop.f32.mrf.mxu0
    %v1261 = vadd.f32 0.0, %v1260
    %v1262 = vpop.f32.mrf.mxu0
    %1263 = vdwg.mxu0
    %v1265 = vrot.slane %v1261, 5
    %v1266 = vrot.slane %v1261, 6
    %v1267 = vrot.slane %v1261, 7
    %v1268 = vrot.slane %v1261, 1
    %v1269 = vrot.slane %v1261, 2
    %v1270 = vrot.slane %v1261, 3
    %v1271 = vrot.slane %v1261, 4
    %v1280 = vadd.f32 %v139, %v1265
    %v1281 = vadd.f32 %v144, %v1266
    %v1282 = vadd.f32 %v149, %v1267
    %v1283 = vadd.f32 %v154, %v1261
    %v1284 = vadd.f32 %v159, %v1268
    %v1285 = vadd.f32 %v164, %v1269
    %v1286 = vadd.f32 %v169, %v1270
    %v1287 = vadd.f32 %v174, %v1271
    %v1288 = vxor.u32 %v1280, 2147483648
    %v1289 = vxor.u32 %v1281, 2147483648
    %v1290 = vxor.u32 %v1282, 2147483648
    %v1291 = vxor.u32 %v1283, 2147483648
    %v1292 = vxor.u32 %v1284, 2147483648
    %v1293 = vxor.u32 %v1285, 2147483648
    %v1294 = vxor.u32 %v1286, 2147483648
    %v1295 = vxor.u32 %v1287, 2147483648
    %v1296 = vmul.f32 %v1288, 1.442695
    %v1297 = vpow.pop %v1296
    %v1298 = vmul.f32 %v1289, 1.442695
    %v1299 = vpow.pop %v1298
    %v1300 = vmul.f32 %v1290, 1.442695
    %v1301 = vpow.pop %v1300
    %v1302 = vmul.f32 %v1291, 1.442695
    %v1303 = vpow.pop %v1302
    %v1304 = vmul.f32 %v1292, 1.442695
    %v1305 = vpow.pop %v1304
    %v1306 = vmul.f32 %v1293, 1.442695
    %v1307 = vpow.pop %v1306
    %v1308 = vmul.f32 %v1294, 1.442695
    %v1309 = vpow.pop %v1308
    %v1310 = vmul.f32 %v1295, 1.442695
    %v1311 = vpow.pop %v1310
    %v1312 = vadd.f32 %v1297, 1.0
    %v1313 = vadd.f32 %v1299, 1.0
    %v1314 = vadd.f32 %v1301, 1.0
    %v1315 = vadd.f32 %v1303, 1.0
    %v1316 = vadd.f32 %v1305, 1.0
    %v1317 = vadd.f32 %v1307, 1.0
    %v1318 = vadd.f32 %v1309, 1.0
    %v1319 = vadd.f32 %v1311, 1.0
    %v1320 = vrcp.pop %v1312
    %v1321 = vmul.f32 1.0, %v1320
    %v1322 = vrcp.pop %v1313
    %v1323 = vmul.f32 1.0, %v1322
    %v1324 = vrcp.pop %v1314
    %v1325 = vmul.f32 1.0, %v1324
    %v1326 = vrcp.pop %v1315
    %v1327 = vmul.f32 1.0, %v1326
    %v1328 = vrcp.pop %v1316
    %v1329 = vmul.f32 1.0, %v1328
    %v1330 = vrcp.pop %v1317
    %v1331 = vmul.f32 1.0, %v1330
    %v1332 = vrcp.pop %v1318
    %v1333 = vmul.f32 1.0, %v1332
    %v1334 = vrcp.pop %v1319
    %v1335 = vmul.f32 1.0, %v1334
    %v1336 = vadd.f32 %v1261, %v334
    %v1338 = vrot.slane %v1336, 5
    %v1339 = vrot.slane %v1336, 6
    %v1340 = vrot.slane %v1336, 7
    %v1341 = vrot.slane %v1336, 1
    %v1342 = vrot.slane %v1336, 2
    %v1343 = vrot.slane %v1336, 3
    %v1344 = vrot.slane %v1336, 4
    %1345 = vrot.lane.b32.xlu0 %v1338, 64
    %v1346 = vpop.permute.xlu0 %1345
    %1347 = vrot.lane.b32.xlu0 %v1339, 64
    %v1348 = vpop.permute.xlu0 %1347
    %1349 = vrot.lane.b32.xlu0 %v1340, 64
    %v1350 = vpop.permute.xlu0 %1349
    %1351 = vrot.lane.b32.xlu0 %v1336, 64
    %v1352 = vpop.permute.xlu0 %1351
    %1353 = vrot.lane.b32.xlu0 %v1341, 64
    %v1354 = vpop.permute.xlu0 %1353
    %1355 = vrot.lane.b32.xlu0 %v1342, 64
    %v1356 = vpop.permute.xlu0 %1355
    %1357 = vrot.lane.b32.xlu0 %v1343, 64
    %v1358 = vpop.permute.xlu0 %1357
    %1359 = vrot.lane.b32.xlu0 %v1344, 64
    %v1360 = vpop.permute.xlu0 %1359
    %v1369 = vmul.f32 %v1321, %v1346
    %v1370 = vmul.f32 %v1323, %v1348
    %v1371 = vmul.f32 %v1325, %v1350
    %v1372 = vmul.f32 %v1327, %v1352
    %v1373 = vmul.f32 %v1329, %v1354
    %v1374 = vmul.f32 %v1331, %v1356
    %v1375 = vmul.f32 %v1333, %v1358
    %v1376 = vmul.f32 %v1335, %v1360
    %1385 = vrot.lane.b32.xlu0 %v1369, 64
    %v1386 = vpop.permute.xlu0 %1385
    %1387 = vrot.lane.b32.xlu0 %v1370, 64
    %v1388 = vpop.permute.xlu0 %1387
    %1389 = vrot.lane.b32.xlu0 %v1371, 64
    %v1390 = vpop.permute.xlu0 %1389
    %1391 = vrot.lane.b32.xlu0 %v1372, 64
    %v1392 = vpop.permute.xlu0 %1391
    %1393 = vrot.lane.b32.xlu0 %v1373, 64
    %v1394 = vpop.permute.xlu0 %1393
    %1395 = vrot.lane.b32.xlu0 %v1374, 64
    %v1396 = vpop.permute.xlu0 %1395
    %1397 = vrot.lane.b32.xlu0 %v1375, 64
    %v1398 = vpop.permute.xlu0 %1397
    %1399 = vrot.lane.b32.xlu0 %v1376, 64
    %v1400 = vpop.permute.xlu0 %1399
    %v1409 = vadd.f32 %v139, %v1386
    %v1410 = vadd.f32 %v144, %v1388
    %v1411 = vadd.f32 %v149, %v1390
    %v1412 = vadd.f32 %v154, %v1392
    %v1413 = vadd.f32 %v159, %v1394
    %v1414 = vadd.f32 %v164, %v1396
    %v1415 = vadd.f32 %v169, %v1398
    %v1416 = vadd.f32 %v174, %v1400
    %v1417 = vtanh.pop %v1409
    %v1418 = vtanh.pop %v1410
    %v1419 = vtanh.pop %v1411
    %v1420 = vtanh.pop %v1412
    %v1421 = vtanh.pop %v1413
    %v1422 = vtanh.pop %v1414
    %v1423 = vtanh.pop %v1415
    %v1424 = vtanh.pop %v1416
    %v1425 = vsub.f32 1.0, %v1321
    %v1426 = vsub.f32 1.0, %v1323
    %v1427 = vsub.f32 1.0, %v1325
    %v1428 = vsub.f32 1.0, %v1327
    %v1429 = vsub.f32 1.0, %v1329
    %v1430 = vsub.f32 1.0, %v1331
    %v1431 = vsub.f32 1.0, %v1333
    %v1432 = vsub.f32 1.0, %v1335
    %1441 = vrot.lane.b32.xlu0 %v1417, 96
    %v1442 = vpop.permute.xlu0 %1441
    %1443 = vrot.lane.b32.xlu0 %v1418, 96
    %v1444 = vpop.permute.xlu0 %1443
    %1445 = vrot.lane.b32.xlu0 %v1419, 96
    %v1446 = vpop.permute.xlu0 %1445
    %1447 = vrot.lane.b32.xlu0 %v1420, 96
    %v1448 = vpop.permute.xlu0 %1447
    %1449 = vrot.lane.b32.xlu0 %v1421, 96
    %v1450 = vpop.permute.xlu0 %1449
    %1451 = vrot.lane.b32.xlu0 %v1422, 96
    %v1452 = vpop.permute.xlu0 %1451
    %1453 = vrot.lane.b32.xlu0 %v1423, 96
    %v1454 = vpop.permute.xlu0 %1453
    %1455 = vrot.lane.b32.xlu0 %v1424, 96
    %v1456 = vpop.permute.xlu0 %1455
    %v1465 = vmul.f32 %v1425, %v1442
    %v1466 = vmul.f32 %v1426, %v1444
    %v1467 = vmul.f32 %v1427, %v1446
    %v1468 = vmul.f32 %v1428, %v1448
    %v1469 = vmul.f32 %v1429, %v1450
    %v1470 = vmul.f32 %v1430, %v1452
    %v1471 = vmul.f32 %v1431, %v1454
    %v1472 = vmul.f32 %v1432, %v1456
    %v1473 = vrot.slane %v1160, 7
    %v1474 = vrot.slane %v1161, 7
    %v1475 = vrot.slane %v1162, 7
    %v1476 = vrot.slane %v1164, 7
    %v1477 = vrot.slane %v1165, 7
    %v1478 = vrot.slane %v1166, 7
    %v1479 = vrot.slane %v1167, 7
    %v1488 = vmul.f32 %v1321, %v1473
    %v1489 = vmul.f32 %v1323, %v1474
    %v1490 = vmul.f32 %v1325, %v1475
    %v1491 = vmul.f32 %v1327, %v1180
    %v1492 = vmul.f32 %v1329, %v1476
    %v1493 = vmul.f32 %v1331, %v1477
    %v1494 = vmul.f32 %v1333, %v1478
    %v1495 = vmul.f32 %v1335, %v1479
    %v1496 = vadd.f32 %v1465, %v1488
    %v1497 = vadd.f32 %v1466, %v1489
    %v1498 = vadd.f32 %v1467, %v1490
    %v1499 = vadd.f32 %v1468, %v1491
    %v1500 = vadd.f32 %v1469, %v1492
    %v1501 = vadd.f32 %v1470, %v1493
    %v1502 = vadd.f32 %v1471, %v1494
    %v1503 = vadd.f32 %v1472, %v1495
    %v1512 = vrot.slane %v1496, 3
    %v1513 = vrot.slane %v1497, 2
    %v1514 = vsel %vm498, %v1513, %v1512
    %v1515 = vrot.slane %v1498, 1
    %v1516 = vsel %vm501, %v1515, %v1514
    %v1517 = vsel %vm504, %v1499, %v1516
    %v1518 = vrot.slane %v1500, 7
    %v1519 = vsel %vm507, %v1518, %v1517
    %v1520 = vrot.slane %v1501, 6
    %v1521 = vsel %vm510, %v1520, %v1519
    %v1522 = vrot.slane %v1502, 5
    %v1523 = vsel %vm513, %v1522, %v1521
    %v1524 = vrot.slane %v1503, 4
    %v1525 = vsel %vm516, %v1524, %v1523
    %1526 = vrot.lane.b32.xlu0 %v1525, 96
    %v1527 = vpop.permute.xlu0 %1526
    %v1528 = vsel %vm182, %v1527, 0
    %1530 = vmatprep.subr.mxu0 0.0
    %1531 = vmatpush1.msra.mxu0 0.0
    %1532 = vmatprep.subr.mxu0 0.0
    %1533 = vmatpush1.msra.mxu0 0.0
    %1534 = vmatprep.subr.mxu0 0.0
    %1535 = vmatpush1.msra.mxu0 0.0
    %1536 = vmatprep.subr.mxu0 0.0
    %1537 = vmatpush1.msra.mxu0 0.0
    %1538 = vmatprep.subr.mxu0 0.0
    %1539 = vmatpush1.msra.mxu0 0.0
    %1540 = vmatprep.subr.mxu0 0.0
    %1541 = vmatpush1.msra.mxu0 0.0
    %1542 = vmatprep.subr.mxu0 0.0
    %1543 = vmatpush1.msra.mxu0 0.0
    %1544 = vmatprep.subr.mxu0 0.0
    %1545 = vmatpush1.msra.mxu0 0.0
    %1546 = vmatprep.subr.mxu0 0.0
    %1547 = vmatpush1.msra.mxu0 0.0
    %1548 = vmatprep.subr.mxu0 0.0
    %1549 = vmatpush1.msra.mxu0 0.0
    %1550 = vmatprep.subr.mxu0 0.0
    %1551 = vmatpush1.msra.mxu0 0.0
    %1552 = vmatprep.subr.mxu0 0.0
    %1553 = vmatpush1.msra.mxu0 0.0
    %1554 = vmatprep.subr.mxu0 0.0
    %1555 = vmatpush1.msra.mxu0 %v180
    %1556 = vmatprep.subr.mxu0 0.0
    %1557 = vmatpush1.msra.mxu0 %v179
    %1558 = vmatprep.subr.mxu0 0.0
    %1559 = vmatpush1.msra.mxu0 %v178
    %1560 = vmatprep.subr.mxu0 0.0
    %1561 = vmatpush1.msra.mxu0 %v177
    %1562 = vmatprep.subr.mxu0 0.0
    %1563 = vmatpush2.msra.mxu0 0.0
    %1564 = vmatprep.subr.mxu0 0.0
    %1565 = vmatpush2.msra.mxu0 0.0
    %1566 = vmatprep.subr.mxu0 0.0
    %1567 = vmatpush2.msra.mxu0 0.0
    %1568 = vmatprep.subr.mxu0 0.0
    %1569 = vmatpush2.msra.mxu0 0.0
    %1570 = vmatprep.subr.mxu0 0.0
    %1571 = vmatpush2.msra.mxu0 0.0
    %1572 = vmatprep.subr.mxu0 0.0
    %1573 = vmatpush2.msra.mxu0 0.0
    %1574 = vmatprep.subr.mxu0 0.0
    %1575 = vmatpush2.msra.mxu0 0.0
    %1576 = vmatprep.subr.mxu0 0.0
    %1577 = vmatpush2.msra.mxu0 0.0
    %1578 = vmatprep.subr.mxu0 0.0
    %1579 = vmatpush2.msra.mxu0 0.0
    %1580 = vmatprep.subr.mxu0 0.0
    %1581 = vmatpush2.msra.mxu0 0.0
    %1582 = vmatprep.subr.mxu0 0.0
    %1583 = vmatpush2.msra.mxu0 0.0
    %1584 = vmatprep.subr.mxu0 0.0
    %1585 = vmatpush2.msra.mxu0 0.0
    %1586 = vmatprep.subr.mxu0 0.0
    %1587 = vmatpush2.msra.mxu0 0.0
    %1588 = vmatprep.subr.mxu0 0.0
    %1589 = vmatpush2.msra.mxu0 0.0
    %1590 = vmatprep.subr.mxu0 0.0
    %1591 = vmatpush2.msra.mxu0 0.0
    %1592 = vmatprep.subr.mxu0 0.0
    %1593 = vmatpush2.msra.mxu0 0.0
    %1594 = vmatprep.mubr.f32.mxu0 0.0
    %1595 = vmatmul.mubr.f32.gmra.mxu0 %v1528
    %v1596 = vpop.f32.mrf.mxu0
    %v1597 = vadd.f32 0.0, %v1596
    %v1598 = vpop.f32.mrf.mxu0
    %1599 = vdwg.mxu0
    %v1601 = vrot.slane %v1597, 4
    %v1602 = vrot.slane %v1597, 5
    %v1603 = vrot.slane %v1597, 6
    %v1604 = vrot.slane %v1597, 7
    %v1605 = vrot.slane %v1597, 1
    %v1606 = vrot.slane %v1597, 2
    %v1607 = vrot.slane %v1597, 3
    %v1616 = vadd.f32 %v139, %v1601
    %v1617 = vadd.f32 %v144, %v1602
    %v1618 = vadd.f32 %v149, %v1603
    %v1619 = vadd.f32 %v154, %v1604
    %v1620 = vadd.f32 %v159, %v1597
    %v1621 = vadd.f32 %v164, %v1605
    %v1622 = vadd.f32 %v169, %v1606
    %v1623 = vadd.f32 %v174, %v1607
    %v1624 = vxor.u32 %v1616, 2147483648
    %v1625 = vxor.u32 %v1617, 2147483648
    %v1626 = vxor.u32 %v1618, 2147483648
    %v1627 = vxor.u32 %v1619, 2147483648
    %v1628 = vxor.u32 %v1620, 2147483648
    %v1629 = vxor.u32 %v1621, 2147483648
    %v1630 = vxor.u32 %v1622, 2147483648
    %v1631 = vxor.u32 %v1623, 2147483648
    %v1632 = vmul.f32 %v1624, 1.442695
    %v1633 = vpow.pop %v1632
    %v1634 = vmul.f32 %v1625, 1.442695
    %v1635 = vpow.pop %v1634
    %v1636 = vmul.f32 %v1626, 1.442695
    %v1637 = vpow.pop %v1636
    %v1638 = vmul.f32 %v1627, 1.442695
    %v1639 = vpow.pop %v1638
    %v1640 = vmul.f32 %v1628, 1.442695
    %v1641 = vpow.pop %v1640
    %v1642 = vmul.f32 %v1629, 1.442695
    %v1643 = vpow.pop %v1642
    %v1644 = vmul.f32 %v1630, 1.442695
    %v1645 = vpow.pop %v1644
    %v1646 = vmul.f32 %v1631, 1.442695
    %v1647 = vpow.pop %v1646
    %v1648 = vadd.f32 %v1633, 1.0
    %v1649 = vadd.f32 %v1635, 1.0
    %v1650 = vadd.f32 %v1637, 1.0
    %v1651 = vadd.f32 %v1639, 1.0
    %v1652 = vadd.f32 %v1641, 1.0
    %v1653 = vadd.f32 %v1643, 1.0
    %v1654 = vadd.f32 %v1645, 1.0
    %v1655 = vadd.f32 %v1647, 1.0
    %v1656 = vrcp.pop %v1648
    %v1657 = vmul.f32 1.0, %v1656
    %v1658 = vrcp.pop %v1649
    %v1659 = vmul.f32 1.0, %v1658
    %v1660 = vrcp.pop %v1650
    %v1661 = vmul.f32 1.0, %v1660
    %v1662 = vrcp.pop %v1651
    %v1663 = vmul.f32 1.0, %v1662
    %v1664 = vrcp.pop %v1652
    %v1665 = vmul.f32 1.0, %v1664
    %v1666 = vrcp.pop %v1653
    %v1667 = vmul.f32 1.0, %v1666
    %v1668 = vrcp.pop %v1654
    %v1669 = vmul.f32 1.0, %v1668
    %v1670 = vrcp.pop %v1655
    %v1671 = vmul.f32 1.0, %v1670
    %v1672 = vadd.f32 %v1597, %v334
    %v1674 = vrot.slane %v1672, 4
    %v1675 = vrot.slane %v1672, 5
    %v1676 = vrot.slane %v1672, 6
    %v1677 = vrot.slane %v1672, 7
    %v1678 = vrot.slane %v1672, 1
    %v1679 = vrot.slane %v1672, 2
    %v1680 = vrot.slane %v1672, 3
    %1681 = vrot.lane.b32.xlu0 %v1674, 64
    %v1682 = vpop.permute.xlu0 %1681
    %1683 = vrot.lane.b32.xlu0 %v1675, 64
    %v1684 = vpop.permute.xlu0 %1683
    %1685 = vrot.lane.b32.xlu0 %v1676, 64
    %v1686 = vpop.permute.xlu0 %1685
    %1687 = vrot.lane.b32.xlu0 %v1677, 64
    %v1688 = vpop.permute.xlu0 %1687
    %1689 = vrot.lane.b32.xlu0 %v1672, 64
    %v1690 = vpop.permute.xlu0 %1689
    %1691 = vrot.lane.b32.xlu0 %v1678, 64
    %v1692 = vpop.permute.xlu0 %1691
    %1693 = vrot.lane.b32.xlu0 %v1679, 64
    %v1694 = vpop.permute.xlu0 %1693
    %1695 = vrot.lane.b32.xlu0 %v1680, 64
    %v1696 = vpop.permute.xlu0 %1695
    %v1705 = vmul.f32 %v1657, %v1682
    %v1706 = vmul.f32 %v1659, %v1684
    %v1707 = vmul.f32 %v1661, %v1686
    %v1708 = vmul.f32 %v1663, %v1688
    %v1709 = vmul.f32 %v1665, %v1690
    %v1710 = vmul.f32 %v1667, %v1692
    %v1711 = vmul.f32 %v1669, %v1694
    %v1712 = vmul.f32 %v1671, %v1696
    %1721 = vrot.lane.b32.xlu0 %v1705, 64
    %v1722 = vpop.permute.xlu0 %1721
    %1723 = vrot.lane.b32.xlu0 %v1706, 64
    %v1724 = vpop.permute.xlu0 %1723
    %1725 = vrot.lane.b32.xlu0 %v1707, 64
    %v1726 = vpop.permute.xlu0 %1725
    %1727 = vrot.lane.b32.xlu0 %v1708, 64
    %v1728 = vpop.permute.xlu0 %1727
    %1729 = vrot.lane.b32.xlu0 %v1709, 64
    %v1730 = vpop.permute.xlu0 %1729
    %1731 = vrot.lane.b32.xlu0 %v1710, 64
    %v1732 = vpop.permute.xlu0 %1731
    %1733 = vrot.lane.b32.xlu0 %v1711, 64
    %v1734 = vpop.permute.xlu0 %1733
    %1735 = vrot.lane.b32.xlu0 %v1712, 64
    %v1736 = vpop.permute.xlu0 %1735
    %v1745 = vadd.f32 %v139, %v1722
    %v1746 = vadd.f32 %v144, %v1724
    %v1747 = vadd.f32 %v149, %v1726
    %v1748 = vadd.f32 %v154, %v1728
    %v1749 = vadd.f32 %v159, %v1730
    %v1750 = vadd.f32 %v164, %v1732
    %v1751 = vadd.f32 %v169, %v1734
    %v1752 = vadd.f32 %v174, %v1736
    %v1753 = vtanh.pop %v1745
    %v1754 = vtanh.pop %v1746
    %v1755 = vtanh.pop %v1747
    %v1756 = vtanh.pop %v1748
    %v1757 = vtanh.pop %v1749
    %v1758 = vtanh.pop %v1750
    %v1759 = vtanh.pop %v1751
    %v1760 = vtanh.pop %v1752
    %v1761 = vsub.f32 1.0, %v1657
    %v1762 = vsub.f32 1.0, %v1659
    %v1763 = vsub.f32 1.0, %v1661
    %v1764 = vsub.f32 1.0, %v1663
    %v1765 = vsub.f32 1.0, %v1665
    %v1766 = vsub.f32 1.0, %v1667
    %v1767 = vsub.f32 1.0, %v1669
    %v1768 = vsub.f32 1.0, %v1671
    %1777 = vrot.lane.b32.xlu0 %v1753, 96
    %v1778 = vpop.permute.xlu0 %1777
    %1779 = vrot.lane.b32.xlu0 %v1754, 96
    %v1780 = vpop.permute.xlu0 %1779
    %1781 = vrot.lane.b32.xlu0 %v1755, 96
    %v1782 = vpop.permute.xlu0 %1781
    %1783 = vrot.lane.b32.xlu0 %v1756, 96
    %v1784 = vpop.permute.xlu0 %1783
    %1785 = vrot.lane.b32.xlu0 %v1757, 96
    %v1786 = vpop.permute.xlu0 %1785
    %1787 = vrot.lane.b32.xlu0 %v1758, 96
    %v1788 = vpop.permute.xlu0 %1787
    %1789 = vrot.lane.b32.xlu0 %v1759, 96
    %v1790 = vpop.permute.xlu0 %1789
    %1791 = vrot.lane.b32.xlu0 %v1760, 96
    %v1792 = vpop.permute.xlu0 %1791
    %v1801 = vmul.f32 %v1761, %v1778
    %v1802 = vmul.f32 %v1762, %v1780
    %v1803 = vmul.f32 %v1763, %v1782
    %v1804 = vmul.f32 %v1764, %v1784
    %v1805 = vmul.f32 %v1765, %v1786
    %v1806 = vmul.f32 %v1766, %v1788
    %v1807 = vmul.f32 %v1767, %v1790
    %v1808 = vmul.f32 %v1768, %v1792
    %v1809 = vrot.slane %v1496, 7
    %v1810 = vrot.slane %v1497, 7
    %v1811 = vrot.slane %v1498, 7
    %v1812 = vrot.slane %v1499, 7
    %v1813 = vrot.slane %v1501, 7
    %v1814 = vrot.slane %v1502, 7
    %v1815 = vrot.slane %v1503, 7
    %v1824 = vmul.f32 %v1657, %v1809
    %v1825 = vmul.f32 %v1659, %v1810
    %v1826 = vmul.f32 %v1661, %v1811
    %v1827 = vmul.f32 %v1663, %v1812
    %v1828 = vmul.f32 %v1665, %v1518
    %v1829 = vmul.f32 %v1667, %v1813
    %v1830 = vmul.f32 %v1669, %v1814
    %v1831 = vmul.f32 %v1671, %v1815
    %v1832 = vadd.f32 %v1801, %v1824
    %v1833 = vadd.f32 %v1802, %v1825
    %v1834 = vadd.f32 %v1803, %v1826
    %v1835 = vadd.f32 %v1804, %v1827
    %v1836 = vadd.f32 %v1805, %v1828
    %v1837 = vadd.f32 %v1806, %v1829
    %v1838 = vadd.f32 %v1807, %v1830
    %v1839 = vadd.f32 %v1808, %v1831
    %v1848 = vrot.slane %v1832, 4
    %v1849 = vrot.slane %v1833, 3
    %v1850 = vsel %vm498, %v1849, %v1848
    %v1851 = vrot.slane %v1834, 2
    %v1852 = vsel %vm501, %v1851, %v1850
    %v1853 = vrot.slane %v1835, 1
    %v1854 = vsel %vm504, %v1853, %v1852
    %v1855 = vsel %vm507, %v1836, %v1854
    %v1856 = vrot.slane %v1837, 7
    %v1857 = vsel %vm510, %v1856, %v1855
    %v1858 = vrot.slane %v1838, 6
    %v1859 = vsel %vm513, %v1858, %v1857
    %v1860 = vrot.slane %v1839, 5
    %v1861 = vsel %vm516, %v1860, %v1859
    %1862 = vrot.lane.b32.xlu0 %v1861, 96
    %v1863 = vpop.permute.xlu0 %1862
    %v1864 = vsel %vm182, %v1863, 0
    %1866 = vmatprep.subr.mxu0 0.0
    %1867 = vmatpush1.msra.mxu0 0.0
    %1868 = vmatprep.subr.mxu0 0.0
    %1869 = vmatpush1.msra.mxu0 0.0
    %1870 = vmatprep.subr.mxu0 0.0
    %1871 = vmatpush1.msra.mxu0 0.0
    %1872 = vmatprep.subr.mxu0 0.0
    %1873 = vmatpush1.msra.mxu0 0.0
    %1874 = vmatprep.subr.mxu0 0.0
    %1875 = vmatpush1.msra.mxu0 0.0
    %1876 = vmatprep.subr.mxu0 0.0
    %1877 = vmatpush1.msra.mxu0 0.0
    %1878 = vmatprep.subr.mxu0 0.0
    %1879 = vmatpush1.msra.mxu0 0.0
    %1880 = vmatprep.subr.mxu0 0.0
    %1881 = vmatpush1.msra.mxu0 0.0
    %1882 = vmatprep.subr.mxu0 0.0
    %1883 = vmatpush1.msra.mxu0 0.0
    %1884 = vmatprep.subr.mxu0 0.0
    %1885 = vmatpush1.msra.mxu0 0.0
    %1886 = vmatprep.subr.mxu0 0.0
    %1887 = vmatpush1.msra.mxu0 0.0
    %1888 = vmatprep.subr.mxu0 0.0
    %1889 = vmatpush1.msra.mxu0 0.0
    %1890 = vmatprep.subr.mxu0 0.0
    %1891 = vmatpush1.msra.mxu0 %v180
    %1892 = vmatprep.subr.mxu0 0.0
    %1893 = vmatpush1.msra.mxu0 %v179
    %1894 = vmatprep.subr.mxu0 0.0
    %1895 = vmatpush1.msra.mxu0 %v178
    %1896 = vmatprep.subr.mxu0 0.0
    %1897 = vmatpush1.msra.mxu0 %v177
    %1898 = vmatprep.subr.mxu0 0.0
    %1899 = vmatpush2.msra.mxu0 0.0
    %1900 = vmatprep.subr.mxu0 0.0
    %1901 = vmatpush2.msra.mxu0 0.0
    %1902 = vmatprep.subr.mxu0 0.0
    %1903 = vmatpush2.msra.mxu0 0.0
    %1904 = vmatprep.subr.mxu0 0.0
    %1905 = vmatpush2.msra.mxu0 0.0
    %1906 = vmatprep.subr.mxu0 0.0
    %1907 = vmatpush2.msra.mxu0 0.0
    %1908 = vmatprep.subr.mxu0 0.0
    %1909 = vmatpush2.msra.mxu0 0.0
    %1910 = vmatprep.subr.mxu0 0.0
    %1911 = vmatpush2.msra.mxu0 0.0
    %1912 = vmatprep.subr.mxu0 0.0
    %1913 = vmatpush2.msra.mxu0 0.0
    %1914 = vmatprep.subr.mxu0 0.0
    %1915 = vmatpush2.msra.mxu0 0.0
    %1916 = vmatprep.subr.mxu0 0.0
    %1917 = vmatpush2.msra.mxu0 0.0
    %1918 = vmatprep.subr.mxu0 0.0
    %1919 = vmatpush2.msra.mxu0 0.0
    %1920 = vmatprep.subr.mxu0 0.0
    %1921 = vmatpush2.msra.mxu0 0.0
    %1922 = vmatprep.subr.mxu0 0.0
    %1923 = vmatpush2.msra.mxu0 0.0
    %1924 = vmatprep.subr.mxu0 0.0
    %1925 = vmatpush2.msra.mxu0 0.0
    %1926 = vmatprep.subr.mxu0 0.0
    %1927 = vmatpush2.msra.mxu0 0.0
    %1928 = vmatprep.subr.mxu0 0.0
    %1929 = vmatpush2.msra.mxu0 0.0
    %1930 = vmatprep.mubr.f32.mxu0 0.0
    %1931 = vmatmul.mubr.f32.gmra.mxu0 %v1864
    %v1932 = vpop.f32.mrf.mxu0
    %v1933 = vadd.f32 0.0, %v1932
    %v1934 = vpop.f32.mrf.mxu0
    %1935 = vdwg.mxu0
    %v1937 = vrot.slane %v1933, 3
    %v1938 = vrot.slane %v1933, 4
    %v1939 = vrot.slane %v1933, 5
    %v1940 = vrot.slane %v1933, 6
    %v1941 = vrot.slane %v1933, 7
    %v1942 = vrot.slane %v1933, 1
    %v1943 = vrot.slane %v1933, 2
    %v1952 = vadd.f32 %v139, %v1937
    %v1953 = vadd.f32 %v144, %v1938
    %v1954 = vadd.f32 %v149, %v1939
    %v1955 = vadd.f32 %v154, %v1940
    %v1956 = vadd.f32 %v159, %v1941
    %v1957 = vadd.f32 %v164, %v1933
    %v1958 = vadd.f32 %v169, %v1942
    %v1959 = vadd.f32 %v174, %v1943
    %v1960 = vxor.u32 %v1952, 2147483648
    %v1961 = vxor.u32 %v1953, 2147483648
    %v1962 = vxor.u32 %v1954, 2147483648
    %v1963 = vxor.u32 %v1955, 2147483648
    %v1964 = vxor.u32 %v1956, 2147483648
    %v1965 = vxor.u32 %v1957, 2147483648
    %v1966 = vxor.u32 %v1958, 2147483648
    %v1967 = vxor.u32 %v1959, 2147483648
    %v1968 = vmul.f32 %v1960, 1.442695
    %v1969 = vpow.pop %v1968
    %v1970 = vmul.f32 %v1961, 1.442695
    %v1971 = vpow.pop %v1970
    %v1972 = vmul.f32 %v1962, 1.442695
    %v1973 = vpow.pop %v1972
    %v1974 = vmul.f32 %v1963, 1.442695
    %v1975 = vpow.pop %v1974
    %v1976 = vmul.f32 %v1964, 1.442695
    %v1977 = vpow.pop %v1976
    %v1978 = vmul.f32 %v1965, 1.442695
    %v1979 = vpow.pop %v1978
    %v1980 = vmul.f32 %v1966, 1.442695
    %v1981 = vpow.pop %v1980
    %v1982 = vmul.f32 %v1967, 1.442695
    %v1983 = vpow.pop %v1982
    %v1984 = vadd.f32 %v1969, 1.0
    %v1985 = vadd.f32 %v1971, 1.0
    %v1986 = vadd.f32 %v1973, 1.0
    %v1987 = vadd.f32 %v1975, 1.0
    %v1988 = vadd.f32 %v1977, 1.0
    %v1989 = vadd.f32 %v1979, 1.0
    %v1990 = vadd.f32 %v1981, 1.0
    %v1991 = vadd.f32 %v1983, 1.0
    %v1992 = vrcp.pop %v1984
    %v1993 = vmul.f32 1.0, %v1992
    %v1994 = vrcp.pop %v1985
    %v1995 = vmul.f32 1.0, %v1994
    %v1996 = vrcp.pop %v1986
    %v1997 = vmul.f32 1.0, %v1996
    %v1998 = vrcp.pop %v1987
    %v1999 = vmul.f32 1.0, %v1998
    %v2000 = vrcp.pop %v1988
    %v2001 = vmul.f32 1.0, %v2000
    %v2002 = vrcp.pop %v1989
    %v2003 = vmul.f32 1.0, %v2002
    %v2004 = vrcp.pop %v1990
    %v2005 = vmul.f32 1.0, %v2004
    %v2006 = vrcp.pop %v1991
    %v2007 = vmul.f32 1.0, %v2006
    %v2008 = vadd.f32 %v1933, %v334
    %v2010 = vrot.slane %v2008, 3
    %v2011 = vrot.slane %v2008, 4
    %v2012 = vrot.slane %v2008, 5
    %v2013 = vrot.slane %v2008, 6
    %v2014 = vrot.slane %v2008, 7
    %v2015 = vrot.slane %v2008, 1
    %v2016 = vrot.slane %v2008, 2
    %2017 = vrot.lane.b32.xlu0 %v2010, 64
    %v2018 = vpop.permute.xlu0 %2017
    %2019 = vrot.lane.b32.xlu0 %v2011, 64
    %v2020 = vpop.permute.xlu0 %2019
    %2021 = vrot.lane.b32.xlu0 %v2012, 64
    %v2022 = vpop.permute.xlu0 %2021
    %2023 = vrot.lane.b32.xlu0 %v2013, 64
    %v2024 = vpop.permute.xlu0 %2023
    %2025 = vrot.lane.b32.xlu0 %v2014, 64
    %v2026 = vpop.permute.xlu0 %2025
    %2027 = vrot.lane.b32.xlu0 %v2008, 64
    %v2028 = vpop.permute.xlu0 %2027
    %2029 = vrot.lane.b32.xlu0 %v2015, 64
    %v2030 = vpop.permute.xlu0 %2029
    %2031 = vrot.lane.b32.xlu0 %v2016, 64
    %v2032 = vpop.permute.xlu0 %2031
    %v2041 = vmul.f32 %v1993, %v2018
    %v2042 = vmul.f32 %v1995, %v2020
    %v2043 = vmul.f32 %v1997, %v2022
    %v2044 = vmul.f32 %v1999, %v2024
    %v2045 = vmul.f32 %v2001, %v2026
    %v2046 = vmul.f32 %v2003, %v2028
    %v2047 = vmul.f32 %v2005, %v2030
    %v2048 = vmul.f32 %v2007, %v2032
    %2057 = vrot.lane.b32.xlu0 %v2041, 64
    %v2058 = vpop.permute.xlu0 %2057
    %2059 = vrot.lane.b32.xlu0 %v2042, 64
    %v2060 = vpop.permute.xlu0 %2059
    %2061 = vrot.lane.b32.xlu0 %v2043, 64
    %v2062 = vpop.permute.xlu0 %2061
    %2063 = vrot.lane.b32.xlu0 %v2044, 64
    %v2064 = vpop.permute.xlu0 %2063
    %2065 = vrot.lane.b32.xlu0 %v2045, 64
    %v2066 = vpop.permute.xlu0 %2065
    %2067 = vrot.lane.b32.xlu0 %v2046, 64
    %v2068 = vpop.permute.xlu0 %2067
    %2069 = vrot.lane.b32.xlu0 %v2047, 64
    %v2070 = vpop.permute.xlu0 %2069
    %2071 = vrot.lane.b32.xlu0 %v2048, 64
    %v2072 = vpop.permute.xlu0 %2071
    %v2081 = vadd.f32 %v139, %v2058
    %v2082 = vadd.f32 %v144, %v2060
    %v2083 = vadd.f32 %v149, %v2062
    %v2084 = vadd.f32 %v154, %v2064
    %v2085 = vadd.f32 %v159, %v2066
    %v2086 = vadd.f32 %v164, %v2068
    %v2087 = vadd.f32 %v169, %v2070
    %v2088 = vadd.f32 %v174, %v2072
    %v2089 = vtanh.pop %v2081
    %v2090 = vtanh.pop %v2082
    %v2091 = vtanh.pop %v2083
    %v2092 = vtanh.pop %v2084
    %v2093 = vtanh.pop %v2085
    %v2094 = vtanh.pop %v2086
    %v2095 = vtanh.pop %v2087
    %v2096 = vtanh.pop %v2088
    %v2097 = vsub.f32 1.0, %v1993
    %v2098 = vsub.f32 1.0, %v1995
    %v2099 = vsub.f32 1.0, %v1997
    %v2100 = vsub.f32 1.0, %v1999
    %v2101 = vsub.f32 1.0, %v2001
    %v2102 = vsub.f32 1.0, %v2003
    %v2103 = vsub.f32 1.0, %v2005
    %v2104 = vsub.f32 1.0, %v2007
    %2113 = vrot.lane.b32.xlu0 %v2089, 96
    %v2114 = vpop.permute.xlu0 %2113
    %2115 = vrot.lane.b32.xlu0 %v2090, 96
    %v2116 = vpop.permute.xlu0 %2115
    %2117 = vrot.lane.b32.xlu0 %v2091, 96
    %v2118 = vpop.permute.xlu0 %2117
    %2119 = vrot.lane.b32.xlu0 %v2092, 96
    %v2120 = vpop.permute.xlu0 %2119
    %2121 = vrot.lane.b32.xlu0 %v2093, 96
    %v2122 = vpop.permute.xlu0 %2121
    %2123 = vrot.lane.b32.xlu0 %v2094, 96
    %v2124 = vpop.permute.xlu0 %2123
    %2125 = vrot.lane.b32.xlu0 %v2095, 96
    %v2126 = vpop.permute.xlu0 %2125
    %2127 = vrot.lane.b32.xlu0 %v2096, 96
    %v2128 = vpop.permute.xlu0 %2127
    %v2137 = vmul.f32 %v2097, %v2114
    %v2138 = vmul.f32 %v2098, %v2116
    %v2139 = vmul.f32 %v2099, %v2118
    %v2140 = vmul.f32 %v2100, %v2120
    %v2141 = vmul.f32 %v2101, %v2122
    %v2142 = vmul.f32 %v2102, %v2124
    %v2143 = vmul.f32 %v2103, %v2126
    %v2144 = vmul.f32 %v2104, %v2128
    %v2145 = vrot.slane %v1832, 7
    %v2146 = vrot.slane %v1833, 7
    %v2147 = vrot.slane %v1834, 7
    %v2148 = vrot.slane %v1835, 7
    %v2149 = vrot.slane %v1836, 7
    %v2150 = vrot.slane %v1838, 7
    %v2151 = vrot.slane %v1839, 7
    %v2160 = vmul.f32 %v1993, %v2145
    %v2161 = vmul.f32 %v1995, %v2146
    %v2162 = vmul.f32 %v1997, %v2147
    %v2163 = vmul.f32 %v1999, %v2148
    %v2164 = vmul.f32 %v2001, %v2149
    %v2165 = vmul.f32 %v2003, %v1856
    %v2166 = vmul.f32 %v2005, %v2150
    %v2167 = vmul.f32 %v2007, %v2151
    %v2168 = vadd.f32 %v2137, %v2160
    %v2169 = vadd.f32 %v2138, %v2161
    %v2170 = vadd.f32 %v2139, %v2162
    %v2171 = vadd.f32 %v2140, %v2163
    %v2172 = vadd.f32 %v2141, %v2164
    %v2173 = vadd.f32 %v2142, %v2165
    %v2174 = vadd.f32 %v2143, %v2166
    %v2175 = vadd.f32 %v2144, %v2167
    %v2184 = vrot.slane %v2168, 5
    %v2185 = vrot.slane %v2169, 4
    %v2186 = vsel %vm498, %v2185, %v2184
    %v2187 = vrot.slane %v2170, 3
    %v2188 = vsel %vm501, %v2187, %v2186
    %v2189 = vrot.slane %v2171, 2
    %v2190 = vsel %vm504, %v2189, %v2188
    %v2191 = vrot.slane %v2172, 1
    %v2192 = vsel %vm507, %v2191, %v2190
    %v2193 = vsel %vm510, %v2173, %v2192
    %v2194 = vrot.slane %v2174, 7
    %v2195 = vsel %vm513, %v2194, %v2193
    %v2196 = vrot.slane %v2175, 6
    %v2197 = vsel %vm516, %v2196, %v2195
    %2198 = vrot.lane.b32.xlu0 %v2197, 96
    %v2199 = vpop.permute.xlu0 %2198
    %v2200 = vsel %vm182, %v2199, 0
    %2202 = vmatprep.subr.mxu0 0.0
    %2203 = vmatpush1.msra.mxu0 0.0
    %2204 = vmatprep.subr.mxu0 0.0
    %2205 = vmatpush1.msra.mxu0 0.0
    %2206 = vmatprep.subr.mxu0 0.0
    %2207 = vmatpush1.msra.mxu0 0.0
    %2208 = vmatprep.subr.mxu0 0.0
    %2209 = vmatpush1.msra.mxu0 0.0
    %2210 = vmatprep.subr.mxu0 0.0
    %2211 = vmatpush1.msra.mxu0 0.0
    %2212 = vmatprep.subr.mxu0 0.0
    %2213 = vmatpush1.msra.mxu0 0.0
    %2214 = vmatprep.subr.mxu0 0.0
    %2215 = vmatpush1.msra.mxu0 0.0
    %2216 = vmatprep.subr.mxu0 0.0
    %2217 = vmatpush1.msra.mxu0 0.0
    %2218 = vmatprep.subr.mxu0 0.0
    %2219 = vmatpush1.msra.mxu0 0.0
    %2220 = vmatprep.subr.mxu0 0.0
    %2221 = vmatpush1.msra.mxu0 0.0
    %2222 = vmatprep.subr.mxu0 0.0
    %2223 = vmatpush1.msra.mxu0 0.0
    %2224 = vmatprep.subr.mxu0 0.0
    %2225 = vmatpush1.msra.mxu0 0.0
    %2226 = vmatprep.subr.mxu0 0.0
    %2227 = vmatpush1.msra.mxu0 %v180
    %2228 = vmatprep.subr.mxu0 0.0
    %2229 = vmatpush1.msra.mxu0 %v179
    %2230 = vmatprep.subr.mxu0 0.0
    %2231 = vmatpush1.msra.mxu0 %v178
    %2232 = vmatprep.subr.mxu0 0.0
    %2233 = vmatpush1.msra.mxu0 %v177
    %2234 = vmatprep.subr.mxu0 0.0
    %2235 = vmatpush2.msra.mxu0 0.0
    %2236 = vmatprep.subr.mxu0 0.0
    %2237 = vmatpush2.msra.mxu0 0.0
    %2238 = vmatprep.subr.mxu0 0.0
    %2239 = vmatpush2.msra.mxu0 0.0
    %2240 = vmatprep.subr.mxu0 0.0
    %2241 = vmatpush2.msra.mxu0 0.0
    %2242 = vmatprep.subr.mxu0 0.0
    %2243 = vmatpush2.msra.mxu0 0.0
    %2244 = vmatprep.subr.mxu0 0.0
    %2245 = vmatpush2.msra.mxu0 0.0
    %2246 = vmatprep.subr.mxu0 0.0
    %2247 = vmatpush2.msra.mxu0 0.0
    %2248 = vmatprep.subr.mxu0 0.0
    %2249 = vmatpush2.msra.mxu0 0.0
    %2250 = vmatprep.subr.mxu0 0.0
    %2251 = vmatpush2.msra.mxu0 0.0
    %2252 = vmatprep.subr.mxu0 0.0
    %2253 = vmatpush2.msra.mxu0 0.0
    %2254 = vmatprep.subr.mxu0 0.0
    %2255 = vmatpush2.msra.mxu0 0.0
    %2256 = vmatprep.subr.mxu0 0.0
    %2257 = vmatpush2.msra.mxu0 0.0
    %2258 = vmatprep.subr.mxu0 0.0
    %2259 = vmatpush2.msra.mxu0 0.0
    %2260 = vmatprep.subr.mxu0 0.0
    %2261 = vmatpush2.msra.mxu0 0.0
    %2262 = vmatprep.subr.mxu0 0.0
    %2263 = vmatpush2.msra.mxu0 0.0
    %2264 = vmatprep.subr.mxu0 0.0
    %2265 = vmatpush2.msra.mxu0 0.0
    %2266 = vmatprep.mubr.f32.mxu0 0.0
    %2267 = vmatmul.mubr.f32.gmra.mxu0 %v2200
    %v2268 = vpop.f32.mrf.mxu0
    %v2269 = vadd.f32 0.0, %v2268
    %v2270 = vpop.f32.mrf.mxu0
    %2271 = vdwg.mxu0
    %v2273 = vrot.slane %v2269, 2
    %v2274 = vrot.slane %v2269, 3
    %v2275 = vrot.slane %v2269, 4
    %v2276 = vrot.slane %v2269, 5
    %v2277 = vrot.slane %v2269, 6
    %v2278 = vrot.slane %v2269, 7
    %v2279 = vrot.slane %v2269, 1
    %v2288 = vadd.f32 %v139, %v2273
    %v2289 = vadd.f32 %v144, %v2274
    %v2290 = vadd.f32 %v149, %v2275
    %v2291 = vadd.f32 %v154, %v2276
    %v2292 = vadd.f32 %v159, %v2277
    %v2293 = vadd.f32 %v164, %v2278
    %v2294 = vadd.f32 %v169, %v2269
    %v2295 = vadd.f32 %v174, %v2279
    %v2296 = vxor.u32 %v2288, 2147483648
    %v2297 = vxor.u32 %v2289, 2147483648
    %v2298 = vxor.u32 %v2290, 2147483648
    %v2299 = vxor.u32 %v2291, 2147483648
    %v2300 = vxor.u32 %v2292, 2147483648
    %v2301 = vxor.u32 %v2293, 2147483648
    %v2302 = vxor.u32 %v2294, 2147483648
    %v2303 = vxor.u32 %v2295, 2147483648
    %v2304 = vmul.f32 %v2296, 1.442695
    %v2305 = vpow.pop %v2304
    %v2306 = vmul.f32 %v2297, 1.442695
    %v2307 = vpow.pop %v2306
    %v2308 = vmul.f32 %v2298, 1.442695
    %v2309 = vpow.pop %v2308
    %v2310 = vmul.f32 %v2299, 1.442695
    %v2311 = vpow.pop %v2310
    %v2312 = vmul.f32 %v2300, 1.442695
    %v2313 = vpow.pop %v2312
    %v2314 = vmul.f32 %v2301, 1.442695
    %v2315 = vpow.pop %v2314
    %v2316 = vmul.f32 %v2302, 1.442695
    %v2317 = vpow.pop %v2316
    %v2318 = vmul.f32 %v2303, 1.442695
    %v2319 = vpow.pop %v2318
    %v2320 = vadd.f32 %v2305, 1.0
    %v2321 = vadd.f32 %v2307, 1.0
    %v2322 = vadd.f32 %v2309, 1.0
    %v2323 = vadd.f32 %v2311, 1.0
    %v2324 = vadd.f32 %v2313, 1.0
    %v2325 = vadd.f32 %v2315, 1.0
    %v2326 = vadd.f32 %v2317, 1.0
    %v2327 = vadd.f32 %v2319, 1.0
    %v2328 = vrcp.pop %v2320
    %v2329 = vmul.f32 1.0, %v2328
    %v2330 = vrcp.pop %v2321
    %v2331 = vmul.f32 1.0, %v2330
    %v2332 = vrcp.pop %v2322
    %v2333 = vmul.f32 1.0, %v2332
    %v2334 = vrcp.pop %v2323
    %v2335 = vmul.f32 1.0, %v2334
    %v2336 = vrcp.pop %v2324
    %v2337 = vmul.f32 1.0, %v2336
    %v2338 = vrcp.pop %v2325
    %v2339 = vmul.f32 1.0, %v2338
    %v2340 = vrcp.pop %v2326
    %v2341 = vmul.f32 1.0, %v2340
    %v2342 = vrcp.pop %v2327
    %v2343 = vmul.f32 1.0, %v2342
    %v2344 = vadd.f32 %v2269, %v334
    %v2346 = vrot.slane %v2344, 2
    %v2347 = vrot.slane %v2344, 3
    %v2348 = vrot.slane %v2344, 4
    %v2349 = vrot.slane %v2344, 5
    %v2350 = vrot.slane %v2344, 6
    %v2351 = vrot.slane %v2344, 7
    %v2352 = vrot.slane %v2344, 1
    %2353 = vrot.lane.b32.xlu0 %v2346, 64
    %v2354 = vpop.permute.xlu0 %2353
    %2355 = vrot.lane.b32.xlu0 %v2347, 64
    %v2356 = vpop.permute.xlu0 %2355
    %2357 = vrot.lane.b32.xlu0 %v2348, 64
    %v2358 = vpop.permute.xlu0 %2357
    %2359 = vrot.lane.b32.xlu0 %v2349, 64
    %v2360 = vpop.permute.xlu0 %2359
    %2361 = vrot.lane.b32.xlu0 %v2350, 64
    %v2362 = vpop.permute.xlu0 %2361
    %2363 = vrot.lane.b32.xlu0 %v2351, 64
    %v2364 = vpop.permute.xlu0 %2363
    %2365 = vrot.lane.b32.xlu0 %v2344, 64
    %v2366 = vpop.permute.xlu0 %2365
    %2367 = vrot.lane.b32.xlu0 %v2352, 64
    %v2368 = vpop.permute.xlu0 %2367
    %v2377 = vmul.f32 %v2329, %v2354
    %v2378 = vmul.f32 %v2331, %v2356
    %v2379 = vmul.f32 %v2333, %v2358
    %v2380 = vmul.f32 %v2335, %v2360
    %v2381 = vmul.f32 %v2337, %v2362
    %v2382 = vmul.f32 %v2339, %v2364
    %v2383 = vmul.f32 %v2341, %v2366
    %v2384 = vmul.f32 %v2343, %v2368
    %2393 = vrot.lane.b32.xlu0 %v2377, 64
    %v2394 = vpop.permute.xlu0 %2393
    %2395 = vrot.lane.b32.xlu0 %v2378, 64
    %v2396 = vpop.permute.xlu0 %2395
    %2397 = vrot.lane.b32.xlu0 %v2379, 64
    %v2398 = vpop.permute.xlu0 %2397
    %2399 = vrot.lane.b32.xlu0 %v2380, 64
    %v2400 = vpop.permute.xlu0 %2399
    %2401 = vrot.lane.b32.xlu0 %v2381, 64
    %v2402 = vpop.permute.xlu0 %2401
    %2403 = vrot.lane.b32.xlu0 %v2382, 64
    %v2404 = vpop.permute.xlu0 %2403
    %2405 = vrot.lane.b32.xlu0 %v2383, 64
    %v2406 = vpop.permute.xlu0 %2405
    %2407 = vrot.lane.b32.xlu0 %v2384, 64
    %v2408 = vpop.permute.xlu0 %2407
    %v2417 = vadd.f32 %v139, %v2394
    %v2418 = vadd.f32 %v144, %v2396
    %v2419 = vadd.f32 %v149, %v2398
    %v2420 = vadd.f32 %v154, %v2400
    %v2421 = vadd.f32 %v159, %v2402
    %v2422 = vadd.f32 %v164, %v2404
    %v2423 = vadd.f32 %v169, %v2406
    %v2424 = vadd.f32 %v174, %v2408
    %v2425 = vtanh.pop %v2417
    %v2426 = vtanh.pop %v2418
    %v2427 = vtanh.pop %v2419
    %v2428 = vtanh.pop %v2420
    %v2429 = vtanh.pop %v2421
    %v2430 = vtanh.pop %v2422
    %v2431 = vtanh.pop %v2423
    %v2432 = vtanh.pop %v2424
    %v2433 = vsub.f32 1.0, %v2329
    %v2434 = vsub.f32 1.0, %v2331
    %v2435 = vsub.f32 1.0, %v2333
    %v2436 = vsub.f32 1.0, %v2335
    %v2437 = vsub.f32 1.0, %v2337
    %v2438 = vsub.f32 1.0, %v2339
    %v2439 = vsub.f32 1.0, %v2341
    %v2440 = vsub.f32 1.0, %v2343
    %2449 = vrot.lane.b32.xlu0 %v2425, 96
    %v2450 = vpop.permute.xlu0 %2449
    %2451 = vrot.lane.b32.xlu0 %v2426, 96
    %v2452 = vpop.permute.xlu0 %2451
    %2453 = vrot.lane.b32.xlu0 %v2427, 96
    %v2454 = vpop.permute.xlu0 %2453
    %2455 = vrot.lane.b32.xlu0 %v2428, 96
    %v2456 = vpop.permute.xlu0 %2455
    %2457 = vrot.lane.b32.xlu0 %v2429, 96
    %v2458 = vpop.permute.xlu0 %2457
    %2459 = vrot.lane.b32.xlu0 %v2430, 96
    %v2460 = vpop.permute.xlu0 %2459
    %2461 = vrot.lane.b32.xlu0 %v2431, 96
    %v2462 = vpop.permute.xlu0 %2461
    %2463 = vrot.lane.b32.xlu0 %v2432, 96
    %v2464 = vpop.permute.xlu0 %2463
    %v2473 = vmul.f32 %v2433, %v2450
    %v2474 = vmul.f32 %v2434, %v2452
    %v2475 = vmul.f32 %v2435, %v2454
    %v2476 = vmul.f32 %v2436, %v2456
    %v2477 = vmul.f32 %v2437, %v2458
    %v2478 = vmul.f32 %v2438, %v2460
    %v2479 = vmul.f32 %v2439, %v2462
    %v2480 = vmul.f32 %v2440, %v2464
    %v2481 = vrot.slane %v2168, 7
    %v2482 = vrot.slane %v2169, 7
    %v2483 = vrot.slane %v2170, 7
    %v2484 = vrot.slane %v2171, 7
    %v2485 = vrot.slane %v2172, 7
    %v2486 = vrot.slane %v2173, 7
    %v2487 = vrot.slane %v2175, 7
    %v2496 = vmul.f32 %v2329, %v2481
    %v2497 = vmul.f32 %v2331, %v2482
    %v2498 = vmul.f32 %v2333, %v2483
    %v2499 = vmul.f32 %v2335, %v2484
    %v2500 = vmul.f32 %v2337, %v2485
    %v2501 = vmul.f32 %v2339, %v2486
    %v2502 = vmul.f32 %v2341, %v2194
    %v2503 = vmul.f32 %v2343, %v2487
    %v2504 = vadd.f32 %v2473, %v2496
    %v2505 = vadd.f32 %v2474, %v2497
    %v2506 = vadd.f32 %v2475, %v2498
    %v2507 = vadd.f32 %v2476, %v2499
    %v2508 = vadd.f32 %v2477, %v2500
    %v2509 = vadd.f32 %v2478, %v2501
    %v2510 = vadd.f32 %v2479, %v2502
    %v2511 = vadd.f32 %v2480, %v2503
    %v2520 = vrot.slane %v2504, 6
    %v2521 = vrot.slane %v2505, 5
    %v2522 = vsel %vm498, %v2521, %v2520
    %v2523 = vrot.slane %v2506, 4
    %v2524 = vsel %vm501, %v2523, %v2522
    %v2525 = vrot.slane %v2507, 3
    %v2526 = vsel %vm504, %v2525, %v2524
    %v2527 = vrot.slane %v2508, 2
    %v2528 = vsel %vm507, %v2527, %v2526
    %v2529 = vrot.slane %v2509, 1
    %v2530 = vsel %vm510, %v2529, %v2528
    %v2531 = vsel %vm513, %v2510, %v2530
    %v2532 = vrot.slane %v2511, 7
    %v2533 = vsel %vm516, %v2532, %v2531
    %2534 = vrot.lane.b32.xlu0 %v2533, 96
    %v2535 = vpop.permute.xlu0 %2534
    %v2536 = vsel %vm182, %v2535, 0
    %2538 = vmatprep.subr.mxu0 0.0
    %2539 = vmatpush1.msra.mxu0 0.0
    %2540 = vmatprep.subr.mxu0 0.0
    %2541 = vmatpush1.msra.mxu0 0.0
    %2542 = vmatprep.subr.mxu0 0.0
    %2543 = vmatpush1.msra.mxu0 0.0
    %2544 = vmatprep.subr.mxu0 0.0
    %2545 = vmatpush1.msra.mxu0 0.0
    %2546 = vmatprep.subr.mxu0 0.0
    %2547 = vmatpush1.msra.mxu0 0.0
    %2548 = vmatprep.subr.mxu0 0.0
    %2549 = vmatpush1.msra.mxu0 0.0
    %2550 = vmatprep.subr.mxu0 0.0
    %2551 = vmatpush1.msra.mxu0 0.0
    %2552 = vmatprep.subr.mxu0 0.0
    %2553 = vmatpush1.msra.mxu0 0.0
    %2554 = vmatprep.subr.mxu0 0.0
    %2555 = vmatpush1.msra.mxu0 0.0
    %2556 = vmatprep.subr.mxu0 0.0
    %2557 = vmatpush1.msra.mxu0 0.0
    %2558 = vmatprep.subr.mxu0 0.0
    %2559 = vmatpush1.msra.mxu0 0.0
    %2560 = vmatprep.subr.mxu0 0.0
    %2561 = vmatpush1.msra.mxu0 0.0
    %2562 = vmatprep.subr.mxu0 0.0
    %2563 = vmatpush1.msra.mxu0 %v180
    %2564 = vmatprep.subr.mxu0 0.0
    %2565 = vmatpush1.msra.mxu0 %v179
    %2566 = vmatprep.subr.mxu0 0.0
    %2567 = vmatpush1.msra.mxu0 %v178
    %2568 = vmatprep.subr.mxu0 0.0
    %2569 = vmatpush1.msra.mxu0 %v177
    %2570 = vmatprep.subr.mxu0 0.0
    %2571 = vmatpush2.msra.mxu0 0.0
    %2572 = vmatprep.subr.mxu0 0.0
    %2573 = vmatpush2.msra.mxu0 0.0
    %2574 = vmatprep.subr.mxu0 0.0
    %2575 = vmatpush2.msra.mxu0 0.0
    %2576 = vmatprep.subr.mxu0 0.0
    %2577 = vmatpush2.msra.mxu0 0.0
    %2578 = vmatprep.subr.mxu0 0.0
    %2579 = vmatpush2.msra.mxu0 0.0
    %2580 = vmatprep.subr.mxu0 0.0
    %2581 = vmatpush2.msra.mxu0 0.0
    %2582 = vmatprep.subr.mxu0 0.0
    %2583 = vmatpush2.msra.mxu0 0.0
    %2584 = vmatprep.subr.mxu0 0.0
    %2585 = vmatpush2.msra.mxu0 0.0
    %2586 = vmatprep.subr.mxu0 0.0
    %2587 = vmatpush2.msra.mxu0 0.0
    %2588 = vmatprep.subr.mxu0 0.0
    %2589 = vmatpush2.msra.mxu0 0.0
    %2590 = vmatprep.subr.mxu0 0.0
    %2591 = vmatpush2.msra.mxu0 0.0
    %2592 = vmatprep.subr.mxu0 0.0
    %2593 = vmatpush2.msra.mxu0 0.0
    %2594 = vmatprep.subr.mxu0 0.0
    %2595 = vmatpush2.msra.mxu0 0.0
    %2596 = vmatprep.subr.mxu0 0.0
    %2597 = vmatpush2.msra.mxu0 0.0
    %2598 = vmatprep.subr.mxu0 0.0
    %2599 = vmatpush2.msra.mxu0 0.0
    %2600 = vmatprep.subr.mxu0 0.0
    %2601 = vmatpush2.msra.mxu0 0.0
    %2602 = vmatprep.mubr.f32.mxu0 0.0
    %2603 = vmatmul.mubr.f32.gmra.mxu0 %v2536
    %v2604 = vpop.f32.mrf.mxu0
    %v2605 = vadd.f32 0.0, %v2604
    %v2606 = vpop.f32.mrf.mxu0
    %2607 = vdwg.mxu0
    %v2609 = vrot.slane %v2605, 1
    %v2610 = vrot.slane %v2605, 2
    %v2611 = vrot.slane %v2605, 3
    %v2612 = vrot.slane %v2605, 4
    %v2613 = vrot.slane %v2605, 5
    %v2614 = vrot.slane %v2605, 6
    %v2615 = vrot.slane %v2605, 7
    %v2624 = vadd.f32 %v139, %v2609
    %v2625 = vadd.f32 %v144, %v2610
    %v2626 = vadd.f32 %v149, %v2611
    %v2627 = vadd.f32 %v154, %v2612
    %v2628 = vadd.f32 %v159, %v2613
    %v2629 = vadd.f32 %v164, %v2614
    %v2630 = vadd.f32 %v169, %v2615
    %v2631 = vadd.f32 %v174, %v2605
    %v2632 = vxor.u32 %v2624, 2147483648
    %v2633 = vxor.u32 %v2625, 2147483648
    %v2634 = vxor.u32 %v2626, 2147483648
    %v2635 = vxor.u32 %v2627, 2147483648
    %v2636 = vxor.u32 %v2628, 2147483648
    %v2637 = vxor.u32 %v2629, 2147483648
    %v2638 = vxor.u32 %v2630, 2147483648
    %v2639 = vxor.u32 %v2631, 2147483648
    %v2640 = vmul.f32 %v2632, 1.442695
    %v2641 = vpow.pop %v2640
    %v2642 = vmul.f32 %v2633, 1.442695
    %v2643 = vpow.pop %v2642
    %v2644 = vmul.f32 %v2634, 1.442695
    %v2645 = vpow.pop %v2644
    %v2646 = vmul.f32 %v2635, 1.442695
    %v2647 = vpow.pop %v2646
    %v2648 = vmul.f32 %v2636, 1.442695
    %v2649 = vpow.pop %v2648
    %v2650 = vmul.f32 %v2637, 1.442695
    %v2651 = vpow.pop %v2650
    %v2652 = vmul.f32 %v2638, 1.442695
    %v2653 = vpow.pop %v2652
    %v2654 = vmul.f32 %v2639, 1.442695
    %v2655 = vpow.pop %v2654
    %v2656 = vadd.f32 %v2641, 1.0
    %v2657 = vadd.f32 %v2643, 1.0
    %v2658 = vadd.f32 %v2645, 1.0
    %v2659 = vadd.f32 %v2647, 1.0
    %v2660 = vadd.f32 %v2649, 1.0
    %v2661 = vadd.f32 %v2651, 1.0
    %v2662 = vadd.f32 %v2653, 1.0
    %v2663 = vadd.f32 %v2655, 1.0
    %v2664 = vrcp.pop %v2656
    %v2665 = vmul.f32 1.0, %v2664
    %v2666 = vrcp.pop %v2657
    %v2667 = vmul.f32 1.0, %v2666
    %v2668 = vrcp.pop %v2658
    %v2669 = vmul.f32 1.0, %v2668
    %v2670 = vrcp.pop %v2659
    %v2671 = vmul.f32 1.0, %v2670
    %v2672 = vrcp.pop %v2660
    %v2673 = vmul.f32 1.0, %v2672
    %v2674 = vrcp.pop %v2661
    %v2675 = vmul.f32 1.0, %v2674
    %v2676 = vrcp.pop %v2662
    %v2677 = vmul.f32 1.0, %v2676
    %v2678 = vrcp.pop %v2663
    %v2679 = vmul.f32 1.0, %v2678
    %v2680 = vadd.f32 %v2605, %v334
    %v2682 = vrot.slane %v2680, 1
    %v2683 = vrot.slane %v2680, 2
    %v2684 = vrot.slane %v2680, 3
    %v2685 = vrot.slane %v2680, 4
    %v2686 = vrot.slane %v2680, 5
    %v2687 = vrot.slane %v2680, 6
    %v2688 = vrot.slane %v2680, 7
    %2689 = vrot.lane.b32.xlu0 %v2682, 64
    %v2690 = vpop.permute.xlu0 %2689
    %2691 = vrot.lane.b32.xlu0 %v2683, 64
    %v2692 = vpop.permute.xlu0 %2691
    %2693 = vrot.lane.b32.xlu0 %v2684, 64
    %v2694 = vpop.permute.xlu0 %2693
    %2695 = vrot.lane.b32.xlu0 %v2685, 64
    %v2696 = vpop.permute.xlu0 %2695
    %2697 = vrot.lane.b32.xlu0 %v2686, 64
    %v2698 = vpop.permute.xlu0 %2697
    %2699 = vrot.lane.b32.xlu0 %v2687, 64
    %v2700 = vpop.permute.xlu0 %2699
    %2701 = vrot.lane.b32.xlu0 %v2688, 64
    %v2702 = vpop.permute.xlu0 %2701
    %2703 = vrot.lane.b32.xlu0 %v2680, 64
    %v2704 = vpop.permute.xlu0 %2703
    %v2713 = vmul.f32 %v2665, %v2690
    %v2714 = vmul.f32 %v2667, %v2692
    %v2715 = vmul.f32 %v2669, %v2694
    %v2716 = vmul.f32 %v2671, %v2696
    %v2717 = vmul.f32 %v2673, %v2698
    %v2718 = vmul.f32 %v2675, %v2700
    %v2719 = vmul.f32 %v2677, %v2702
    %v2720 = vmul.f32 %v2679, %v2704
    %2729 = vrot.lane.b32.xlu0 %v2713, 64
    %v2730 = vpop.permute.xlu0 %2729
    %2731 = vrot.lane.b32.xlu0 %v2714, 64
    %v2732 = vpop.permute.xlu0 %2731
    %2733 = vrot.lane.b32.xlu0 %v2715, 64
    %v2734 = vpop.permute.xlu0 %2733
    %2735 = vrot.lane.b32.xlu0 %v2716, 64
    %v2736 = vpop.permute.xlu0 %2735
    %2737 = vrot.lane.b32.xlu0 %v2717, 64
    %v2738 = vpop.permute.xlu0 %2737
    %2739 = vrot.lane.b32.xlu0 %v2718, 64
    %v2740 = vpop.permute.xlu0 %2739
    %2741 = vrot.lane.b32.xlu0 %v2719, 64
    %v2742 = vpop.permute.xlu0 %2741
    %2743 = vrot.lane.b32.xlu0 %v2720, 64
    %v2744 = vpop.permute.xlu0 %2743
    %v2753 = vadd.f32 %v139, %v2730
    %v2754 = vadd.f32 %v144, %v2732
    %v2755 = vadd.f32 %v149, %v2734
    %v2756 = vadd.f32 %v154, %v2736
    %v2757 = vadd.f32 %v159, %v2738
    %v2758 = vadd.f32 %v164, %v2740
    %v2759 = vadd.f32 %v169, %v2742
    %v2760 = vadd.f32 %v174, %v2744
    %v2761 = vtanh.pop %v2753
    %v2762 = vtanh.pop %v2754
    %v2763 = vtanh.pop %v2755
    %v2764 = vtanh.pop %v2756
    %v2765 = vtanh.pop %v2757
    %v2766 = vtanh.pop %v2758
    %v2767 = vtanh.pop %v2759
    %v2768 = vtanh.pop %v2760
    %v2769 = vsub.f32 1.0, %v2665
    %v2770 = vsub.f32 1.0, %v2667
    %v2771 = vsub.f32 1.0, %v2669
    %v2772 = vsub.f32 1.0, %v2671
    %v2773 = vsub.f32 1.0, %v2673
    %v2774 = vsub.f32 1.0, %v2675
    %v2775 = vsub.f32 1.0, %v2677
    %v2776 = vsub.f32 1.0, %v2679
    %2785 = vrot.lane.b32.xlu0 %v2761, 96
    %v2786 = vpop.permute.xlu0 %2785
    %2787 = vrot.lane.b32.xlu0 %v2762, 96
    %v2788 = vpop.permute.xlu0 %2787
    %2789 = vrot.lane.b32.xlu0 %v2763, 96
    %v2790 = vpop.permute.xlu0 %2789
    %2791 = vrot.lane.b32.xlu0 %v2764, 96
    %v2792 = vpop.permute.xlu0 %2791
    %2793 = vrot.lane.b32.xlu0 %v2765, 96
    %v2794 = vpop.permute.xlu0 %2793
    %2795 = vrot.lane.b32.xlu0 %v2766, 96
    %v2796 = vpop.permute.xlu0 %2795
    %2797 = vrot.lane.b32.xlu0 %v2767, 96
    %v2798 = vpop.permute.xlu0 %2797
    %2799 = vrot.lane.b32.xlu0 %v2768, 96
    %v2800 = vpop.permute.xlu0 %2799
    %v2809 = vmul.f32 %v2769, %v2786
    %v2810 = vmul.f32 %v2770, %v2788
    %v2811 = vmul.f32 %v2771, %v2790
    %v2812 = vmul.f32 %v2772, %v2792
    %v2813 = vmul.f32 %v2773, %v2794
    %v2814 = vmul.f32 %v2774, %v2796
    %v2815 = vmul.f32 %v2775, %v2798
    %v2816 = vmul.f32 %v2776, %v2800
    %v2817 = vrot.slane %v2504, 7
    %v2818 = vrot.slane %v2505, 7
    %v2819 = vrot.slane %v2506, 7
    %v2820 = vrot.slane %v2507, 7
    %v2821 = vrot.slane %v2508, 7
    %v2822 = vrot.slane %v2509, 7
    %v2823 = vrot.slane %v2510, 7
    %v2832 = vmul.f32 %v2665, %v2817
    %v2833 = vmul.f32 %v2667, %v2818
    %v2834 = vmul.f32 %v2669, %v2819
    %v2835 = vmul.f32 %v2671, %v2820
    %v2836 = vmul.f32 %v2673, %v2821
    %v2837 = vmul.f32 %v2675, %v2822
    %v2838 = vmul.f32 %v2677, %v2823
    %v2839 = vmul.f32 %v2679, %v2532
    %v2840 = vadd.f32 %v2809, %v2832
    %v2841 = vadd.f32 %v2810, %v2833
    %v2842 = vadd.f32 %v2811, %v2834
    %v2843 = vadd.f32 %v2812, %v2835
    %v2844 = vadd.f32 %v2813, %v2836
    %v2845 = vadd.f32 %v2814, %v2837
    %v2846 = vadd.f32 %v2815, %v2838
    %v2847 = vadd.f32 %v2816, %v2839
    %v2848 = vld [vmem:[%s5] sm:$0xff]
    %v2849 = vld [vmem:[%s5 + $0x8] sm:$0xff]
    %v2850 = vld [vmem:[%s5 + $0x10] sm:$0xff]
    %v2851 = vld [vmem:[%s5 + $0x18] sm:$0xff]
    %v2852 = vld [vmem:[%s6] sm:$0x1]
    %v2854 = vlaneseq
    %v2855 = vshrl.u32 %v2854, 7
    %v2856 = vsub.s32 0, %v2855
    %v2857 = vrot.slane %v2852, %v2856
    %v2867 = vrot.slane %v2840, 7
    %v2868 = vrot.slane %v2841, 6
    %v2869 = vsel %vm498, %v2868, %v2867
    %v2870 = vrot.slane %v2842, 5
    %v2871 = vsel %vm501, %v2870, %v2869
    %v2872 = vrot.slane %v2843, 4
    %v2873 = vsel %vm504, %v2872, %v2871
    %v2874 = vrot.slane %v2844, 3
    %v2875 = vsel %vm507, %v2874, %v2873
    %v2876 = vrot.slane %v2845, 2
    %v2877 = vsel %vm510, %v2876, %v2875
    %v2878 = vrot.slane %v2846, 1
    %v2879 = vsel %vm513, %v2878, %v2877
    %v2880 = vsel %vm516, %v2847, %v2879
    %2881 = vrot.lane.b32.xlu0 %v2880, 96
    %v2882 = vpop.permute.xlu0 %2881
    %v2883 = vsel %vm182, %v2882, 0
    %2885 = vmatprep.subr.mxu0 0.0
    %2886 = vmatpush1.msra.mxu0 0.0
    %2887 = vmatprep.subr.mxu0 0.0
    %2888 = vmatpush1.msra.mxu0 0.0
    %2889 = vmatprep.subr.mxu0 0.0
    %2890 = vmatpush1.msra.mxu0 0.0
    %2891 = vmatprep.subr.mxu0 0.0
    %2892 = vmatpush1.msra.mxu0 0.0
    %2893 = vmatprep.subr.mxu0 0.0
    %2894 = vmatpush1.msra.mxu0 0.0
    %2895 = vmatprep.subr.mxu0 0.0
    %2896 = vmatpush1.msra.mxu0 0.0
    %2897 = vmatprep.subr.mxu0 0.0
    %2898 = vmatpush1.msra.mxu0 0.0
    %2899 = vmatprep.subr.mxu0 0.0
    %2900 = vmatpush1.msra.mxu0 0.0
    %2901 = vmatprep.subr.mxu0 0.0
    %2902 = vmatpush1.msra.mxu0 0.0
    %2903 = vmatprep.subr.mxu0 0.0
    %2904 = vmatpush1.msra.mxu0 0.0
    %2905 = vmatprep.subr.mxu0 0.0
    %2906 = vmatpush1.msra.mxu0 0.0
    %2907 = vmatprep.subr.mxu0 0.0
    %2908 = vmatpush1.msra.mxu0 0.0
    %2909 = vmatprep.subr.mxu0 0.0
    %2910 = vmatpush1.msra.mxu0 %v2851
    %2911 = vmatprep.subr.mxu0 0.0
    %2912 = vmatpush1.msra.mxu0 %v2850
    %2913 = vmatprep.subr.mxu0 0.0
    %2914 = vmatpush1.msra.mxu0 %v2849
    %2915 = vmatprep.subr.mxu0 0.0
    %2916 = vmatpush1.msra.mxu0 %v2848
    %2917 = vmatprep.subr.mxu0 0.0
    %2918 = vmatpush2.msra.mxu0 0.0
    %2919 = vmatprep.subr.mxu0 0.0
    %2920 = vmatpush2.msra.mxu0 0.0
    %2921 = vmatprep.subr.mxu0 0.0
    %2922 = vmatpush2.msra.mxu0 0.0
    %2923 = vmatprep.subr.mxu0 0.0
    %2924 = vmatpush2.msra.mxu0 0.0
    %2925 = vmatprep.subr.mxu0 0.0
    %2926 = vmatpush2.msra.mxu0 0.0
    %2927 = vmatprep.subr.mxu0 0.0
    %2928 = vmatpush2.msra.mxu0 0.0
    %2929 = vmatprep.subr.mxu0 0.0
    %2930 = vmatpush2.msra.mxu0 0.0
    %2931 = vmatprep.subr.mxu0 0.0
    %2932 = vmatpush2.msra.mxu0 0.0
    %2933 = vmatprep.subr.mxu0 0.0
    %2934 = vmatpush2.msra.mxu0 0.0
    %2935 = vmatprep.subr.mxu0 0.0
    %2936 = vmatpush2.msra.mxu0 0.0
    %2937 = vmatprep.subr.mxu0 0.0
    %2938 = vmatpush2.msra.mxu0 0.0
    %2939 = vmatprep.subr.mxu0 0.0
    %2940 = vmatpush2.msra.mxu0 0.0
    %2941 = vmatprep.subr.mxu0 0.0
    %2942 = vmatpush2.msra.mxu0 0.0
    %2943 = vmatprep.subr.mxu0 0.0
    %2944 = vmatpush2.msra.mxu0 0.0
    %2945 = vmatprep.subr.mxu0 0.0
    %2946 = vmatpush2.msra.mxu0 0.0
    %2947 = vmatprep.subr.mxu0 0.0
    %2948 = vmatpush2.msra.mxu0 0.0
    %2949 = vmatprep.mubr.f32.mxu0 0.0
    %2950 = vmatmul.mubr.f32.gmra.mxu0 %v2883
    %v2951 = vpop.f32.mrf.mxu0
    %v2952 = vadd.f32 %v2857, %v2951
    %v2953 = vpop.f32.mrf.mxu0
    %2954 = vdwg.mxu0
    %2955 = vst.msk [vmem:[#allocation2] sm:$0xff] %vm182, %v2952
    // Predicated region
    $region30: #{tpu_custom_call.1} parent=1 // pred_check
      _
    $region31: #{tpu_custom_call.1} parent=1 // pred_check_branch
      %2957 = sbr.rel (0) target = $region33
    $region32: #{tpu_custom_call.1} parent=1 // pred_region
      %s2959 = ssub.s32 128, 128
      %2960 = vsyncadd [#allocation3], %s2959
      %s2962 = sshll.u32 [#allocation2], 4
      %s2963 = int_to_ptr.vmem [resolvable:$true] %s2962
      %2965 = dma.vmem_to_hbm [thread:$0]  %s2963, 128, %s7, [#allocation3]
    $region33: #{tpu_custom_call.1} parent=1 // pred_fallthru
      _
    // Predicated region
    $region34: #{tpu_custom_call.1} parent=1 // pred_check
      _
    $region35: #{tpu_custom_call.1} parent=1 // pred_check_branch
      %2967 = sbr.rel (0) target = $region37
    $region36: #{tpu_custom_call.1} parent=1 // pred_region
      %2968 = dma.done [#allocation3], 128
    $region37: #{tpu_custom_call.1} parent=1 // pred_fallthru
      _
    %2969 = vsyncpa [#allocation3], 1

</llo_original>
